<compile_context>
chip_gen: v7x
topology: tpu7x:2x2x1
jax: 0.10.0
libtpu: 0.0.40
codegen_flags: <defaults>
</compile_context>

<pallas_src>
import jax
import jax.numpy as jnp
import numpy as np
from jax.experimental import pallas as pl
from jax.experimental.pallas import tpu as pltpu

LANE = 128


def _round_up(v, m):
    return (v + m - 1) // m * m


def arm_kernel(x_ref, w1_ref, s1_ref, b1_ref, w2_ref, s2_ref, b2_ref, o_ref,
               acc_ref):
    """One batch element per grid step (NHWC, channel-padded).

    x_ref  : (1, H, W, Cip)   bf16 input tile
    w1_ref : (3, 3*Cip, Cop)  bf16 3x3 conv weights, index (dy, dx*Cip+ci, co)
    s1_ref : (1, Cop) f32     folded BN1 scale
    b1_ref : (1, Cop) f32     folded BN1 bias
    w2_ref : (Cop, Cop) bf16  1x1 attention conv weights, (in, out)
    s2_ref : (1, Cop) f32     folded BN2 scale
    b2_ref : (1, Cop) f32     folded BN2 bias
    o_ref  : (1, H, W, Cop)   output tile
    acc_ref: (H, W, Cop) f32  VMEM scratch: conv accumulator / feature map
    """
    h, w, cop = o_ref.shape[1], o_ref.shape[2], o_ref.shape[3]
    cip = x_ref.shape[3]

    x = x_ref[0]                                          # (H, W, Cip) bf16

    # Build the three dx-shifted slabs once (3 sublane shifts instead of 9),
    # lane-concatenate them so every MXU dot gets K = 3*Cip, then zero-pad
    # along H so the dy taps become layout-free leading-axis slices.
    zcol = jnp.zeros((h, 1, cip), x.dtype)
    slab_l = jnp.concatenate([zcol, x[:, :w - 1, :]], axis=1)   # dx = 0
    slab_r = jnp.concatenate([x[:, 1:, :], zcol], axis=1)       # dx = 2
    slab = jnp.concatenate([slab_l, x, slab_r], axis=2)         # (H, W, 3*Cip)
    zrow = jnp.zeros((1, w, 3 * cip), x.dtype)
    slab = jnp.concatenate([zrow, slab, zrow], axis=0)          # (H+2, W, 3*Cip)

    # 3x3 conv as 3 dots with K = 3*Cip (bf16 x bf16 -> f32 accumulation).
    for dy in range(3):
        contrib = jax.lax.dot_general(
            slab[dy:dy + h], w1_ref[dy],
            dimension_numbers=(((2,), (0,)), ((), ())),
            preferred_element_type=jnp.float32)                 # (H, W, Cop)
        if dy == 0:
            acc_ref[...] = contrib
        else:
            acc_ref[...] += contrib

    # BN1 (folded) + ReLU in f32, kept in the VMEM scratch.
    acc_ref[...] = jnp.maximum(acc_ref[...] * s1_ref[0] + b1_ref[0], 0.0)

    # Global average pool -> (1, Cop), f32.
    pooled = (jnp.sum(acc_ref[...], axis=(0, 1)) *
              (1.0 / (h * w))).reshape(1, cop)

    # 1x1 attention conv (bf16 MXU) + BN2 (folded) + sigmoid (f32).
    att = jnp.dot(pooled.astype(jnp.bfloat16), w2_ref[...],
                  preferred_element_type=jnp.float32)           # (1, Cop)
    att = att * s2_ref[...] + b2_ref[...]
    att = 1.0 / (1.0 + jnp.exp(-att))

    o_ref[0] = (acc_ref[...] * att.reshape(1, 1, cop)).astype(o_ref.dtype)


@jax.jit
def attention_refinement_nhwc(x_nhwc, w1_hwio, s1, b1, w2_io, s2, b2):
    """x_nhwc: (N, H, W, Cin). Returns (N, H, W, Cout) in x's dtype (NHWC)."""
    n, h, w, cin = x_nhwc.shape
    cout = w1_hwio.shape[-1]
    cip = _round_up(cin, LANE)
    cop = _round_up(cout, LANE)
    out_dtype = x_nhwc.dtype

    # Channel padding to lane width (identity at real channel counts) and
    # bf16 cast for the MXU path.  Scales / biases stay f32.
    x_k = jnp.pad(x_nhwc, ((0, 0), (0, 0), (0, 0),
                           (0, cip - cin))).astype(jnp.bfloat16)
    w1_k = jnp.pad(w1_hwio, ((0, 0), (0, 0), (0, cip - cin), (0, cop - cout)))
    w1_k = w1_k.reshape(3, 3 * cip, cop).astype(jnp.bfloat16)
    w2_k = jnp.pad(w2_io, ((0, cop - cout), (0, cop - cout))).astype(jnp.bfloat16)
    s1_k = jnp.pad(s1.astype(jnp.float32), (0, cop - cout)).reshape(1, cop)
    b1_k = jnp.pad(b1.astype(jnp.float32), (0, cop - cout)).reshape(1, cop)
    s2_k = jnp.pad(s2.astype(jnp.float32), (0, cop - cout)).reshape(1, cop)
    b2_k = jnp.pad(b2.astype(jnp.float32), (0, cop - cout)).reshape(1, cop)

    # Explicit scoped-VMEM budget: double-buffered I/O blocks + in-kernel slab
    # + f32 accumulator + resident weights, with headroom; capped to fit v7x.
    out_bytes = np.dtype(out_dtype).itemsize
    need = (2 * (h * w * cip * 2 + h * w * cop * out_bytes)
            + (h + 2) * w * 3 * cip * 2
            + h * w * cop * 4
            + 3 * 3 * cip * cop * 2 + cop * cop * 2 + 4 * cop * 4)
    vmem_limit = int(min(max(2 * need, 32 << 20), 64 << 20))

    out = pl.pallas_call(
        arm_kernel,
        out_shape=jax.ShapeDtypeStruct((n, h, w, cop), out_dtype),
        grid_spec=pltpu.PrefetchScalarGridSpec(
            num_scalar_prefetch=0,
            grid=(n,),
            in_specs=[
                pl.BlockSpec((1, h, w, cip), lambda b: (b, 0, 0, 0)),
                pl.BlockSpec((3, 3 * cip, cop), lambda b: (0, 0, 0)),
                pl.BlockSpec((1, cop), lambda b: (0, 0)),
                pl.BlockSpec((1, cop), lambda b: (0, 0)),
                pl.BlockSpec((cop, cop), lambda b: (0, 0)),
                pl.BlockSpec((1, cop), lambda b: (0, 0)),
                pl.BlockSpec((1, cop), lambda b: (0, 0)),
            ],
            out_specs=pl.BlockSpec((1, h, w, cop), lambda b: (b, 0, 0, 0)),
            scratch_shapes=[pltpu.VMEM((h, w, cop), jnp.float32)],
        ),
        compiler_params=pltpu.CompilerParams(
            dimension_semantics=("parallel",),
            vmem_limit_bytes=vmem_limit),
    )(x_k, w1_k, s1_k, b1_k, w2_k, s2_k, b2_k)

    return out[..., :cout]


def fold_bn(gamma, beta, mean, var, eps=1e-5):
    scale = gamma / jnp.sqrt(var + eps)
    bias = beta - mean * scale
    return scale, bias


def reference_nhwc(x, w1_hwio, s1, b1, w2_io, s2, b2):
    """Pure-JAX reference (inference-mode BN, matched bf16 MXU casts)."""
    y = jax.lax.conv_general_dilated(
        x.astype(jnp.bfloat16), w1_hwio.astype(jnp.bfloat16),
        window_strides=(1, 1), padding=((1, 1), (1, 1)),
        dimension_numbers=("NHWC", "HWIO", "NHWC"),
        preferred_element_type=jnp.float32)
    y = jnp.maximum(y * s1 + b1, 0.0)
    p = jnp.mean(y, axis=(1, 2))                                  # (N, Cout)
    a = jnp.dot(p.astype(jnp.bfloat16), w2_io.astype(jnp.bfloat16),
                preferred_element_type=jnp.float32)
    a = jax.nn.sigmoid(a * s2 + b2)
    return y * a[:, None, None, :]


if __name__ == "__main__":
    # Small, deterministic setup: N=2, Cin=4, Cout=8, H=W=16 (NHWC).
    N, CIN, COUT, H, W = 2, 4, 8, 16, 16
    key = jax.random.PRNGKey(0)
    kx, k1, k2, kg1, kb1, km1, kv1, kg2, kb2, km2, kv2 = jax.random.split(key, 11)

    x = jax.random.normal(kx, (N, H, W, CIN), jnp.float32)

    # ConvBNReLU params (PyTorch conv weight OIHW -> HWIO for NHWC).
    w1_oihw = jax.random.normal(k1, (COUT, CIN, 3, 3), jnp.float32) * 0.1
    w1_hwio = jnp.transpose(w1_oihw, (2, 3, 1, 0))        # (3, 3, Cin, Cout)
    g1 = 1.0 + 0.1 * jax.random.normal(kg1, (COUT,), jnp.float32)
    bb1 = 0.1 * jax.random.normal(kb1, (COUT,), jnp.float32)
    m1 = 0.1 * jax.random.normal(km1, (COUT,), jnp.float32)
    v1 = jnp.abs(jax.random.normal(kv1, (COUT,), jnp.float32)) + 0.5
    s1, b1 = fold_bn(g1, bb1, m1, v1)

    # Attention branch params (1x1 conv OIHW -> (in, out), + BN).
    w2_oihw = jax.random.normal(k2, (COUT, COUT, 1, 1), jnp.float32) * 0.1
    w2_io = w2_oihw[:, :, 0, 0].T
    g2 = 1.0 + 0.1 * jax.random.normal(kg2, (COUT,), jnp.float32)
    bb2 = 0.1 * jax.random.normal(kb2, (COUT,), jnp.float32)
    m2 = 0.1 * jax.random.normal(km2, (COUT,), jnp.float32)
    v2 = jnp.abs(jax.random.normal(kv2, (COUT,), jnp.float32)) + 0.5
    s2, b2 = fold_bn(g2, bb2, m2, v2)

    out = attention_refinement_nhwc(x, w1_hwio, s1, b1, w2_io, s2, b2)
    out = jax.block_until_ready(out)

    ref = reference_nhwc(x, w1_hwio, s1, b1, w2_io, s2, b2)
    np.testing.assert_allclose(np.asarray(out), np.asarray(ref),
                               rtol=2e-2, atol=2e-2)

    print("KERNEL_OK")
</pallas_src>

<mosaic_0001>
module attributes {stable_mosaic.version = 11 : i64} {
  func.func @arm_kernel(%arg0: i32, %arg1: memref<1x16x16x128xbf16, #tpu.memory_space<vmem>>, %arg2: memref<3x384x128xbf16, #tpu.memory_space<vmem>>, %arg3: memref<1x128xf32, #tpu.memory_space<vmem>>, %arg4: memref<1x128xf32, #tpu.memory_space<vmem>>, %arg5: memref<128x128xbf16, #tpu.memory_space<vmem>>, %arg6: memref<1x128xf32, #tpu.memory_space<vmem>>, %arg7: memref<1x128xf32, #tpu.memory_space<vmem>>, %arg8: memref<1x16x16x128xf32, #tpu.memory_space<vmem>>, %arg9: memref<16x16x128xf32, #tpu.memory_space<vmem>>) attributes {dimension_semantics = [#tpu.dimension_semantics<parallel>], iteration_bounds = array<i64: 2>, scalar_prefetch = 0 : i64, scratch_operands = 1 : i64, tpu.core_type = #tpu.core_type<tc>, window_params = [{transform_indices = @transform_0, window_bounds = array<i64: 1, 16, 16, 128>}, {pipeline_mode = #tpu.pipeline_mode<synchronous>, transform_indices = @transform_1, window_bounds = array<i64: 3, 384, 128>}, {pipeline_mode = #tpu.pipeline_mode<synchronous>, transform_indices = @transform_2, window_bounds = array<i64: 1, 128>}, {pipeline_mode = #tpu.pipeline_mode<synchronous>, transform_indices = @transform_3, window_bounds = array<i64: 1, 128>}, {pipeline_mode = #tpu.pipeline_mode<synchronous>, transform_indices = @transform_4, window_bounds = array<i64: 128, 128>}, {pipeline_mode = #tpu.pipeline_mode<synchronous>, transform_indices = @transform_5, window_bounds = array<i64: 1, 128>}, {pipeline_mode = #tpu.pipeline_mode<synchronous>, transform_indices = @transform_6, window_bounds = array<i64: 1, 128>}, {transform_indices = @transform_7, window_bounds = array<i64: 1, 16, 16, 128>}]} {
    %c0 = arith.constant 0 : index
    %c0_0 = arith.constant 0 : index
    %c0_1 = arith.constant 0 : index
    %c0_2 = arith.constant 0 : index
    %0 = vector.load %arg1[%c0, %c0_0, %c0_1, %c0_2] : memref<1x16x16x128xbf16, #tpu.memory_space<vmem>>, vector<1x16x16x128xbf16>
    %1 = vector.shape_cast %0 : vector<1x16x16x128xbf16> to vector<16x16x128xbf16>
    %cst = arith.constant 0.000000e+00 : bf16
    %2 = vector.broadcast %cst : bf16 to vector<16x1x128xbf16>
    %3 = vector.extract_strided_slice %1 {offsets = [0, 0, 0], sizes = [16, 15, 128], strides = [1, 1, 1]} : vector<16x16x128xbf16> to vector<16x15x128xbf16>
    %4 = tpu.concatenate %2, %3 in 1 : vector<16x1x128xbf16>, vector<16x15x128xbf16> -> vector<16x16x128xbf16>
    %5 = vector.extract_strided_slice %1 {offsets = [0, 1, 0], sizes = [16, 15, 128], strides = [1, 1, 1]} : vector<16x16x128xbf16> to vector<16x15x128xbf16>
    %6 = tpu.concatenate %5, %2 in 1 : vector<16x15x128xbf16>, vector<16x1x128xbf16> -> vector<16x16x128xbf16>
    %7 = tpu.concatenate %4, %1, %6 in 2 : vector<16x16x128xbf16>, vector<16x16x128xbf16>, vector<16x16x128xbf16> -> vector<16x16x384xbf16>
    %cst_3 = arith.constant 0.000000e+00 : bf16
    %8 = vector.broadcast %cst_3 : bf16 to vector<1x16x384xbf16>
    %9 = tpu.concatenate %8, %7, %8 in 0 : vector<1x16x384xbf16>, vector<16x16x384xbf16>, vector<1x16x384xbf16> -> vector<18x16x384xbf16>
    %10 = vector.extract_strided_slice %9 {offsets = [0, 0, 0], sizes = [16, 16, 384], strides = [1, 1, 1]} : vector<18x16x384xbf16> to vector<16x16x384xbf16>
    %c0_4 = arith.constant 0 : index
    %c0_5 = arith.constant 0 : index
    %c0_6 = arith.constant 0 : index
    %11 = vector.load %arg2[%c0_4, %c0_5, %c0_6] : memref<3x384x128xbf16, #tpu.memory_space<vmem>>, vector<1x384x128xbf16>
    %12 = vector.shape_cast %11 : vector<1x384x128xbf16> to vector<384x128xbf16>
    %cst_7 = arith.constant dense<0.000000e+00> : vector<16x16x128xf32>
    %13 = tpu.matmul %10, %12, %cst_7 {dimension_numbers = #tpu.dot_dimension_numbers<[2], [0], [0, 1], [1], [0, 0, 0, 1, 1, 1], [], []>} : vector<16x16x384xbf16>, vector<384x128xbf16>, vector<16x16x128xf32> -> vector<16x16x128xf32>
    %c0_8 = arith.constant 0 : index
    %c0_9 = arith.constant 0 : index
    %c0_10 = arith.constant 0 : index
    %14 = vector.load %arg9[%c0_8, %c0_9, %c0_10] : memref<16x16x128xf32, #tpu.memory_space<vmem>>, vector<16x16x128xf32>
    tpu.vector_store %arg9[%c0_8, %c0_9, %c0_10], %13 {strides = array<i32>} : memref<16x16x128xf32, #tpu.memory_space<vmem>>, vector<16x16x128xf32>,
    %15 = vector.extract_strided_slice %9 {offsets = [1, 0, 0], sizes = [16, 16, 384], strides = [1, 1, 1]} : vector<18x16x384xbf16> to vector<16x16x384xbf16>
    %c1 = arith.constant 1 : index
    %c0_11 = arith.constant 0 : index
    %c0_12 = arith.constant 0 : index
    %16 = vector.load %arg2[%c1, %c0_11, %c0_12] : memref<3x384x128xbf16, #tpu.memory_space<vmem>>, vector<1x384x128xbf16>
    %17 = vector.shape_cast %16 : vector<1x384x128xbf16> to vector<384x128xbf16>
    %cst_13 = arith.constant dense<0.000000e+00> : vector<16x16x128xf32>
    %18 = tpu.matmul %15, %17, %cst_13 {dimension_numbers = #tpu.dot_dimension_numbers<[2], [0], [0, 1], [1], [0, 0, 0, 1, 1, 1], [], []>} : vector<16x16x384xbf16>, vector<384x128xbf16>, vector<16x16x128xf32> -> vector<16x16x128xf32>
    %c0_14 = arith.constant 0 : index
    %c0_15 = arith.constant 0 : index
    %c0_16 = arith.constant 0 : index
    %19 = vector.load %arg9[%c0_14, %c0_15, %c0_16] : memref<16x16x128xf32, #tpu.memory_space<vmem>>, vector<16x16x128xf32>
    %20 = arith.addf %19, %18 : vector<16x16x128xf32>
    %c0_17 = arith.constant 0 : index
    %c0_18 = arith.constant 0 : index
    %c0_19 = arith.constant 0 : index
    %21 = vector.load %arg9[%c0_17, %c0_18, %c0_19] : memref<16x16x128xf32, #tpu.memory_space<vmem>>, vector<16x16x128xf32>
    tpu.vector_store %arg9[%c0_17, %c0_18, %c0_19], %20 {strides = array<i32>} : memref<16x16x128xf32, #tpu.memory_space<vmem>>, vector<16x16x128xf32>,
    %22 = vector.extract_strided_slice %9 {offsets = [2, 0, 0], sizes = [16, 16, 384], strides = [1, 1, 1]} : vector<18x16x384xbf16> to vector<16x16x384xbf16>
    %c2 = arith.constant 2 : index
    %c0_20 = arith.constant 0 : index
    %c0_21 = arith.constant 0 : index
    %23 = vector.load %arg2[%c2, %c0_20, %c0_21] : memref<3x384x128xbf16, #tpu.memory_space<vmem>>, vector<1x384x128xbf16>
    %24 = vector.shape_cast %23 : vector<1x384x128xbf16> to vector<384x128xbf16>
    %cst_22 = arith.constant dense<0.000000e+00> : vector<16x16x128xf32>
    %25 = tpu.matmul %22, %24, %cst_22 {dimension_numbers = #tpu.dot_dimension_numbers<[2], [0], [0, 1], [1], [0, 0, 0, 1, 1, 1], [], []>} : vector<16x16x384xbf16>, vector<384x128xbf16>, vector<16x16x128xf32> -> vector<16x16x128xf32>
    %c0_23 = arith.constant 0 : index
    %c0_24 = arith.constant 0 : index
    %c0_25 = arith.constant 0 : index
    %26 = vector.load %arg9[%c0_23, %c0_24, %c0_25] : memref<16x16x128xf32, #tpu.memory_space<vmem>>, vector<16x16x128xf32>
    %27 = arith.addf %26, %25 : vector<16x16x128xf32>
    %c0_26 = arith.constant 0 : index
    %c0_27 = arith.constant 0 : index
    %c0_28 = arith.constant 0 : index
    %28 = vector.load %arg9[%c0_26, %c0_27, %c0_28] : memref<16x16x128xf32, #tpu.memory_space<vmem>>, vector<16x16x128xf32>
    tpu.vector_store %arg9[%c0_26, %c0_27, %c0_28], %27 {strides = array<i32>} : memref<16x16x128xf32, #tpu.memory_space<vmem>>, vector<16x16x128xf32>,
    %c0_29 = arith.constant 0 : index
    %c0_30 = arith.constant 0 : index
    %c0_31 = arith.constant 0 : index
    %29 = vector.load %arg9[%c0_29, %c0_30, %c0_31] : memref<16x16x128xf32, #tpu.memory_space<vmem>>, vector<16x16x128xf32>
    %c0_32 = arith.constant 0 : index
    %c0_33 = arith.constant 0 : index
    %30 = vector.load %arg3[%c0_32, %c0_33] : memref<1x128xf32, #tpu.memory_space<vmem>>, vector<1x128xf32>
    %31 = vector.shape_cast %30 : vector<1x128xf32> to vector<128xf32>
    %32 = vector.shape_cast %31 : vector<128xf32> to vector<1x1x128xf32>
    %33 = vector.broadcast %32 : vector<1x1x128xf32> to vector<16x16x128xf32>
    %34 = arith.mulf %29, %33 : vector<16x16x128xf32>
    %c0_34 = arith.constant 0 : index
    %c0_35 = arith.constant 0 : index
    %35 = vector.load %arg4[%c0_34, %c0_35] : memref<1x128xf32, #tpu.memory_space<vmem>>, vector<1x128xf32>
    %36 = vector.shape_cast %35 : vector<1x128xf32> to vector<128xf32>
    %37 = vector.shape_cast %36 : vector<128xf32> to vector<1x1x128xf32>
    %38 = vector.broadcast %37 : vector<1x1x128xf32> to vector<16x16x128xf32>
    %39 = arith.addf %34, %38 : vector<16x16x128xf32>
    %cst_36 = arith.constant 0.000000e+00 : f32
    %40 = vector.broadcast %cst_36 : f32 to vector<16x16x128xf32>
    %41 = arith.maximumf %39, %40 : vector<16x16x128xf32>
    %c0_37 = arith.constant 0 : index
    %c0_38 = arith.constant 0 : index
    %c0_39 = arith.constant 0 : index
    %42 = vector.load %arg9[%c0_37, %c0_38, %c0_39] : memref<16x16x128xf32, #tpu.memory_space<vmem>>, vector<16x16x128xf32>
    tpu.vector_store %arg9[%c0_37, %c0_38, %c0_39], %41 {strides = array<i32>} : memref<16x16x128xf32, #tpu.memory_space<vmem>>, vector<16x16x128xf32>,
    %c0_40 = arith.constant 0 : index
    %c0_41 = arith.constant 0 : index
    %c0_42 = arith.constant 0 : index
    %43 = vector.load %arg9[%c0_40, %c0_41, %c0_42] : memref<16x16x128xf32, #tpu.memory_space<vmem>>, vector<16x16x128xf32>
    %cst_43 = arith.constant dense<0.000000e+00> : vector<128xf32>
    %44 = vector.multi_reduction <add>, %43, %cst_43 [0, 1] : vector<16x16x128xf32> to vector<128xf32>
    %cst_44 = arith.constant 3.906250e-03 : f32
    %45 = vector.broadcast %cst_44 : f32 to vector<128xf32>
    %46 = arith.mulf %44, %45 : vector<128xf32>
    %47 = vector.shape_cast %46 : vector<128xf32> to vector<1x128xf32>
    %48 = arith.truncf %47 : vector<1x128xf32> to vector<1x128xbf16>
    %c0_45 = arith.constant 0 : index
    %c0_46 = arith.constant 0 : index
    %49 = vector.load %arg5[%c0_45, %c0_46] : memref<128x128xbf16, #tpu.memory_space<vmem>>, vector<128x128xbf16>
    %cst_47 = arith.constant dense<0.000000e+00> : vector<1x128xf32>
    %50 = tpu.matmul %48, %49, %cst_47 {dimension_numbers = #tpu.dot_dimension_numbers<[1], [0], [0], [1], [0, 0, 1, 1], [], []>} : vector<1x128xbf16>, vector<128x128xbf16>, vector<1x128xf32> -> vector<1x128xf32>
    %c0_48 = arith.constant 0 : index
    %c0_49 = arith.constant 0 : index
    %51 = vector.load %arg6[%c0_48, %c0_49] : memref<1x128xf32, #tpu.memory_space<vmem>>, vector<1x128xf32>
    %52 = arith.mulf %50, %51 : vector<1x128xf32>
    %c0_50 = arith.constant 0 : index
    %c0_51 = arith.constant 0 : index
    %53 = vector.load %arg7[%c0_50, %c0_51] : memref<1x128xf32, #tpu.memory_space<vmem>>, vector<1x128xf32>
    %54 = arith.addf %52, %53 : vector<1x128xf32>
    %cst_52 = arith.constant 0.000000e+00 : f32
    %55 = vector.broadcast %cst_52 : f32 to vector<1x128xf32>
    %56 = arith.subf %55, %54 : vector<1x128xf32>
    %57 = math.exp %56 : vector<1x128xf32>
    %cst_53 = arith.constant 1.000000e+00 : f32
    %58 = vector.broadcast %cst_53 : f32 to vector<1x128xf32>
    %59 = arith.addf %58, %57 : vector<1x128xf32>
    %cst_54 = arith.constant 1.000000e+00 : f32
    %60 = vector.broadcast %cst_54 : f32 to vector<1x128xf32>
    %61 = arith.divf %60, %59 : vector<1x128xf32>
    %c0_55 = arith.constant 0 : index
    %c0_56 = arith.constant 0 : index
    %c0_57 = arith.constant 0 : index
    %62 = vector.load %arg9[%c0_55, %c0_56, %c0_57] : memref<16x16x128xf32, #tpu.memory_space<vmem>>, vector<16x16x128xf32>
    %63 = vector.shape_cast %61 : vector<1x128xf32> to vector<1x1x128xf32>
    %64 = vector.broadcast %63 : vector<1x1x128xf32> to vector<16x16x128xf32>
    %65 = arith.mulf %62, %64 : vector<16x16x128xf32>
    %c0_58 = arith.constant 0 : index
    %c0_59 = arith.constant 0 : index
    %c0_60 = arith.constant 0 : index
    %c0_61 = arith.constant 0 : index
    %66 = vector.load %arg8[%c0_58, %c0_59, %c0_60, %c0_61] : memref<1x16x16x128xf32, #tpu.memory_space<vmem>>, vector<1x16x16x128xf32>
    %67 = vector.shape_cast %66 : vector<1x16x16x128xf32> to vector<16x16x128xf32>
    %68 = vector.shape_cast %65 : vector<16x16x128xf32> to vector<1x16x16x128xf32>
    tpu.vector_store %arg8[%c0_58, %c0_59, %c0_60, %c0_61], %68 {strides = array<i32>} : memref<1x16x16x128xf32, #tpu.memory_space<vmem>>, vector<1x16x16x128xf32>,
    return
  }
  func.func @transform_0(%arg0: i32) -> (i32, i32, i32, i32) {
    %c0_i32 = arith.constant 0 : i32
    %c0_i32_0 = arith.constant 0 : i32
    %c0_i32_1 = arith.constant 0 : i32
    %c0_i32_2 = arith.constant 0 : i32
    return %arg0, %c0_i32, %c0_i32_0, %c0_i32_1 : i32, i32, i32, i32
  }
  func.func @transform_1(%arg0: i32) -> (i32, i32, i32) {
    %c0_i32 = arith.constant 0 : i32
    %c0_i32_0 = arith.constant 0 : i32
    %c0_i32_1 = arith.constant 0 : i32
    %c0_i32_2 = arith.constant 0 : i32
    return %c0_i32, %c0_i32_0, %c0_i32_1 : i32, i32, i32
  }
  func.func @transform_2(%arg0: i32) -> (i32, i32) {
    %c0_i32 = arith.constant 0 : i32
    %c0_i32_0 = arith.constant 0 : i32
    %c0_i32_1 = arith.constant 0 : i32
    return %c0_i32, %c0_i32_0 : i32, i32
  }
  func.func @transform_3(%arg0: i32) -> (i32, i32) {
    %c0_i32 = arith.constant 0 : i32
    %c0_i32_0 = arith.constant 0 : i32
    %c0_i32_1 = arith.constant 0 : i32
    return %c0_i32, %c0_i32_0 : i32, i32
  }
  func.func @transform_4(%arg0: i32) -> (i32, i32) {
    %c0_i32 = arith.constant 0 : i32
    %c0_i32_0 = arith.constant 0 : i32
    %c0_i32_1 = arith.constant 0 : i32
    return %c0_i32, %c0_i32_0 : i32, i32
  }
  func.func @transform_5(%arg0: i32) -> (i32, i32) {
    %c0_i32 = arith.constant 0 : i32
    %c0_i32_0 = arith.constant 0 : i32
    %c0_i32_1 = arith.constant 0 : i32
    return %c0_i32, %c0_i32_0 : i32, i32
  }
  func.func @transform_6(%arg0: i32) -> (i32, i32) {
    %c0_i32 = arith.constant 0 : i32
    %c0_i32_0 = arith.constant 0 : i32
    %c0_i32_1 = arith.constant 0 : i32
    return %c0_i32, %c0_i32_0 : i32, i32
  }
  func.func @transform_7(%arg0: i32) -> (i32, i32, i32, i32) {
    %c0_i32 = arith.constant 0 : i32
    %c0_i32_0 = arith.constant 0 : i32
    %c0_i32_1 = arith.constant 0 : i32
    %c0_i32_2 = arith.constant 0 : i32
    return %arg0, %c0_i32, %c0_i32_0, %c0_i32_1 : i32, i32, i32, i32
  }
}

</mosaic_0001>

<llo_original>
// kernel: attention_refinement_nhwc.1
$region0: #{attention_refinement_nhwc.1}
  #allocation0 [shape = 'u32[]', space=smem, size = 0x4, offset = 0x4, fixed_abs, tag = 'smem constant byte address 0x4 - core index']
  #allocation1 [shape = 'u32[144,128]{1,0:T(1,128)}', space=vmem, size = 0x12000, scoped, tag = 'internal scratch']
  #allocation2 [shape = 'f32[16,16,128]{2,1,0:T(8,128)}', space=vmem, size = 0x20000, scoped, tag = 'scratch operand']
  %s0 = inlined_call_operand.vmem [shape: bf16[2,16,16,128], index: 0, kind: input, shape index: {}]
  %s1 = inlined_call_operand.vmem [shape: bf16[3,384,128], index: 1, kind: input, shape index: {}]
  %s2 = inlined_call_operand.vmem [shape: f32[1,128], index: 2, kind: input, shape index: {}]
  %s3 = inlined_call_operand.vmem [shape: f32[1,128], index: 3, kind: input, shape index: {}]
  %s4 = inlined_call_operand.vmem [shape: bf16[128,128], index: 4, kind: input, shape index: {}]
  %s5 = inlined_call_operand.vmem [shape: f32[1,128], index: 5, kind: input, shape index: {}]
  %s6 = inlined_call_operand.vmem [shape: f32[1,128], index: 6, kind: input, shape index: {}]
  %s7 = inlined_call_operand.vmem [shape: f32[2,16,16,128], index: 7, kind: output, shape index: {}]
  %s8 = sld [smem:[#allocation0]]
  $region61: #{attention_refinement_nhwc.1} parent=0
    _
  %s10 = ssub.s32 1, %s8
  %s11 = scalar_select 0, %s10, %s8
  loop: start=0, step=1, limit=4
  $region2: #{attention_refinement_nhwc.1} parent=0 // loop_pre_header
    _
  $region3: #{attention_refinement_nhwc.1} parent=0 // loop_header
    %s13 = sphi 0, %s17
    %p14 = scmp.ge.s32.totalorder %s13, 4
    %s23 = sphi 0, %s25
    %s26 = sphi 0, %s23
    %s27 = sphi 0, %s26
    %s43 = sphi 0, %s27
    %s47 = sphi 0, %s47
    %s49 = sphi 0, %s47
    %s50 = sphi 0, %s49
    %s64 = sphi 0, %s50
    %s68 = sphi 0, %s68
    %s70 = sphi 0, %s68
    %s71 = sphi 0, %s70
    %s85 = sphi 0, %s71
    %s89 = sphi 0, %s89
    %s91 = sphi 0, %s89
    %s92 = sphi 0, %s91
    %s106 = sphi 0, %s92
    %s110 = sphi 0, %s110
    %s112 = sphi 0, %s110
    %s113 = sphi 0, %s112
    %s127 = sphi 0, %s113
    %s131 = sphi 0, %s131
    %s133 = sphi 0, %s131
    %s134 = sphi 0, %s133
    %s148 = sphi 0, %s134
    %s152 = sphi 0, %s152
    %s154 = sphi 0, %s152
    %s155 = sphi 0, %s154
    %s169 = sphi 0, %s155
    %s175 = sphi 0, %s177
    %s178 = sphi 0, %s175
    %s179 = sphi 0, %s178
    %s195 = sphi 0, %s179
  $region4: #{attention_refinement_nhwc.1} parent=0 // loop_header_branch
    %16 = sbr.rel (%p14) target = $region8
  $region5: #{attention_refinement_nhwc.1} parent=0 // loop_body
    %s18 = ssub.s32 %s13, 1
    %s19 = ssub.s32 %s13, 2
    %s20 = sadd.s32 %s13, 1
    %s21 = ssub.s32 %s13, %s20
    %p22 = scmp.eq.s32.totalorder %s21, 0
    %s24 = sadd.s32 %s23, 1
    %s25 = scalar_select %p22, %s23, %s24
    %p28 = pneg %p22
    %p29 = scmp.eq.s32.totalorder %s13, 1
    %p30 = por %p28, %p29
    %p31 = scmp.ne.s32.totalorder %s23, %s26
    %p32 = scmp.eq.s32.totalorder %s13, 0
    %p33 = por %p31, %p32
    %p34 = scmp.ne.s32.totalorder %s23, %s26
    %p35 = scmp.eq.s32.totalorder %s18, 1
    %p36 = por %p34, %p35
    %p37 = scmp.ne.s32.totalorder %s26, %s27
    %p38 = scmp.eq.s32.totalorder %s18, 0
    %p39 = por %p37, %p38
    %p40 = scmp.ne.s32.totalorder %s26, %s27
    %p41 = scmp.eq.s32.totalorder %s19, 1
    %p42 = por %p40, %p41
    %p44 = scmp.ne.s32.totalorder %s27, %s43
    %p45 = scmp.eq.s32.totalorder %s19, 0
    %p46 = por %p44, %p45
    %s48 = sadd.s32 %s47, 1
    %p51 = scmp.eq.s32.totalorder %s13, 1
    %p52 = scmp.ne.s32.totalorder %s47, %s49
    %p53 = scmp.eq.s32.totalorder %s13, 0
    %p54 = por %p52, %p53
    %p55 = scmp.ne.s32.totalorder %s47, %s49
    %p56 = scmp.eq.s32.totalorder %s18, 1
    %p57 = por %p55, %p56
    %p58 = scmp.ne.s32.totalorder %s49, %s50
    %p59 = scmp.eq.s32.totalorder %s18, 0
    %p60 = por %p58, %p59
    %p61 = scmp.ne.s32.totalorder %s49, %s50
    %p62 = scmp.eq.s32.totalorder %s19, 1
    %p63 = por %p61, %p62
    %p65 = scmp.ne.s32.totalorder %s50, %s64
    %p66 = scmp.eq.s32.totalorder %s19, 0
    %p67 = por %p65, %p66
    %s69 = sadd.s32 %s68, 1
    %p72 = scmp.eq.s32.totalorder %s13, 1
    %p73 = scmp.ne.s32.totalorder %s68, %s70
    %p74 = scmp.eq.s32.totalorder %s13, 0
    %p75 = por %p73, %p74
    %p76 = scmp.ne.s32.totalorder %s68, %s70
    %p77 = scmp.eq.s32.totalorder %s18, 1
    %p78 = por %p76, %p77
    %p79 = scmp.ne.s32.totalorder %s70, %s71
    %p80 = scmp.eq.s32.totalorder %s18, 0
    %p81 = por %p79, %p80
    %p82 = scmp.ne.s32.totalorder %s70, %s71
    %p83 = scmp.eq.s32.totalorder %s19, 1
    %p84 = por %p82, %p83
    %p86 = scmp.ne.s32.totalorder %s71, %s85
    %p87 = scmp.eq.s32.totalorder %s19, 0
    %p88 = por %p86, %p87
    %s90 = sadd.s32 %s89, 1
    %p93 = scmp.eq.s32.totalorder %s13, 1
    %p94 = scmp.ne.s32.totalorder %s89, %s91
    %p95 = scmp.eq.s32.totalorder %s13, 0
    %p96 = por %p94, %p95
    %p97 = scmp.ne.s32.totalorder %s89, %s91
    %p98 = scmp.eq.s32.totalorder %s18, 1
    %p99 = por %p97, %p98
    %p100 = scmp.ne.s32.totalorder %s91, %s92
    %p101 = scmp.eq.s32.totalorder %s18, 0
    %p102 = por %p100, %p101
    %p103 = scmp.ne.s32.totalorder %s91, %s92
    %p104 = scmp.eq.s32.totalorder %s19, 1
    %p105 = por %p103, %p104
    %p107 = scmp.ne.s32.totalorder %s92, %s106
    %p108 = scmp.eq.s32.totalorder %s19, 0
    %p109 = por %p107, %p108
    %s111 = sadd.s32 %s110, 1
    %p114 = scmp.eq.s32.totalorder %s13, 1
    %p115 = scmp.ne.s32.totalorder %s110, %s112
    %p116 = scmp.eq.s32.totalorder %s13, 0
    %p117 = por %p115, %p116
    %p118 = scmp.ne.s32.totalorder %s110, %s112
    %p119 = scmp.eq.s32.totalorder %s18, 1
    %p120 = por %p118, %p119
    %p121 = scmp.ne.s32.totalorder %s112, %s113
    %p122 = scmp.eq.s32.totalorder %s18, 0
    %p123 = por %p121, %p122
    %p124 = scmp.ne.s32.totalorder %s112, %s113
    %p125 = scmp.eq.s32.totalorder %s19, 1
    %p126 = por %p124, %p125
    %p128 = scmp.ne.s32.totalorder %s113, %s127
    %p129 = scmp.eq.s32.totalorder %s19, 0
    %p130 = por %p128, %p129
    %s132 = sadd.s32 %s131, 1
    %p135 = scmp.eq.s32.totalorder %s13, 1
    %p136 = scmp.ne.s32.totalorder %s131, %s133
    %p137 = scmp.eq.s32.totalorder %s13, 0
    %p138 = por %p136, %p137
    %p139 = scmp.ne.s32.totalorder %s131, %s133
    %p140 = scmp.eq.s32.totalorder %s18, 1
    %p141 = por %p139, %p140
    %p142 = scmp.ne.s32.totalorder %s133, %s134
    %p143 = scmp.eq.s32.totalorder %s18, 0
    %p144 = por %p142, %p143
    %p145 = scmp.ne.s32.totalorder %s133, %s134
    %p146 = scmp.eq.s32.totalorder %s19, 1
    %p147 = por %p145, %p146
    %p149 = scmp.ne.s32.totalorder %s134, %s148
    %p150 = scmp.eq.s32.totalorder %s19, 0
    %p151 = por %p149, %p150
    %s153 = sadd.s32 %s152, 1
    %p156 = scmp.eq.s32.totalorder %s13, 1
    %p157 = scmp.ne.s32.totalorder %s152, %s154
    %p158 = scmp.eq.s32.totalorder %s13, 0
    %p159 = por %p157, %p158
    %p160 = scmp.ne.s32.totalorder %s152, %s154
    %p161 = scmp.eq.s32.totalorder %s18, 1
    %p162 = por %p160, %p161
    %p163 = scmp.ne.s32.totalorder %s154, %s155
    %p164 = scmp.eq.s32.totalorder %s18, 0
    %p165 = por %p163, %p164
    %p166 = scmp.ne.s32.totalorder %s154, %s155
    %p167 = scmp.eq.s32.totalorder %s19, 1
    %p168 = por %p166, %p167
    %p170 = scmp.ne.s32.totalorder %s155, %s169
    %p171 = scmp.eq.s32.totalorder %s19, 0
    %p172 = por %p170, %p171
    %s173 = ssub.s32 %s13, %s20
    %p174 = scmp.eq.s32.totalorder %s173, 0
    %s176 = sadd.s32 %s175, 1
    %s177 = scalar_select %p174, %s175, %s176
    %p180 = pneg %p174
    %p181 = scmp.eq.s32.totalorder %s13, 1
    %p182 = por %p180, %p181
    %p183 = scmp.ne.s32.totalorder %s175, %s178
    %p184 = scmp.eq.s32.totalorder %s13, 0
    %p185 = por %p183, %p184
    %p186 = scmp.ne.s32.totalorder %s175, %s178
    %p187 = scmp.eq.s32.totalorder %s18, 1
    %p188 = por %p186, %p187
    %p189 = scmp.ne.s32.totalorder %s178, %s179
    %p190 = scmp.eq.s32.totalorder %s18, 0
    %p191 = por %p189, %p190
    %p192 = scmp.ne.s32.totalorder %s178, %s179
    %p193 = scmp.eq.s32.totalorder %s19, 1
    %p194 = por %p192, %p193
    %p196 = scmp.ne.s32.totalorder %s179, %s195
    %p197 = scmp.eq.s32.totalorder %s19, 0
    %p198 = por %p196, %p197
    %p199 = scmp.le.s32.totalorder 1, %s13
    %p200 = scmp.lt.s32.totalorder %s13, 3
    %p201 = pnand %p199, %p200
    %p202 = pneg %p201
    // Predicated region
    $region9: #{attention_refinement_nhwc.1} parent=5 // pred_check
      _
    $region10: #{attention_refinement_nhwc.1} parent=5 // pred_check_branch
      %204 = sbr.rel (%p201) target = $region12
    $region11: #{attention_refinement_nhwc.1} parent=5 // pred_region
      %s205 = ssub.s32 %s13, 1
      // Predicated region
      $region13: #{attention_refinement_nhwc.1} parent=11 // pred_check
        %p206 = pneg %p60
      $region14: #{attention_refinement_nhwc.1} parent=11 // pred_check_branch
        %208 = sbr.rel (%p206) target = $region16
      $region15: #{attention_refinement_nhwc.1} parent=11 // pred_region
        _
      $region16: #{attention_refinement_nhwc.1} parent=11 // pred_fallthru
        _
      // Predicated region
      $region17: #{attention_refinement_nhwc.1} parent=11 // pred_check
        %p209 = pneg %p81
      $region18: #{attention_refinement_nhwc.1} parent=11 // pred_check_branch
        %211 = sbr.rel (%p209) target = $region20
      $region19: #{attention_refinement_nhwc.1} parent=11 // pred_region
        _
      $region20: #{attention_refinement_nhwc.1} parent=11 // pred_fallthru
        _
      // Predicated region
      $region21: #{attention_refinement_nhwc.1} parent=11 // pred_check
        %p212 = pneg %p102
      $region22: #{attention_refinement_nhwc.1} parent=11 // pred_check_branch
        %214 = sbr.rel (%p212) target = $region24
      $region23: #{attention_refinement_nhwc.1} parent=11 // pred_region
        _
      $region24: #{attention_refinement_nhwc.1} parent=11 // pred_fallthru
        _
      // Predicated region
      $region25: #{attention_refinement_nhwc.1} parent=11 // pred_check
        %p215 = pneg %p123
      $region26: #{attention_refinement_nhwc.1} parent=11 // pred_check_branch
        %217 = sbr.rel (%p215) target = $region28
      $region27: #{attention_refinement_nhwc.1} parent=11 // pred_region
        _
      $region28: #{attention_refinement_nhwc.1} parent=11 // pred_fallthru
        _
      // Predicated region
      $region29: #{attention_refinement_nhwc.1} parent=11 // pred_check
        %p218 = pneg %p144
      $region30: #{attention_refinement_nhwc.1} parent=11 // pred_check_branch
        %220 = sbr.rel (%p218) target = $region32
      $region31: #{attention_refinement_nhwc.1} parent=11 // pred_region
        _
      $region32: #{attention_refinement_nhwc.1} parent=11 // pred_fallthru
        _
      // Predicated region
      $region33: #{attention_refinement_nhwc.1} parent=11 // pred_check
        %p221 = pneg %p165
      $region34: #{attention_refinement_nhwc.1} parent=11 // pred_check_branch
        %223 = sbr.rel (%p221) target = $region36
      $region35: #{attention_refinement_nhwc.1} parent=11 // pred_region
        _
      $region36: #{attention_refinement_nhwc.1} parent=11 // pred_fallthru
        _
    $region12: #{attention_refinement_nhwc.1} parent=5 // pred_fallthru
      _
    %p224 = scmp.lt.s32.totalorder %s13, 2
    // Predicated region
    $region37: #{attention_refinement_nhwc.1} parent=5 // pred_check
      %p225 = pneg %p224
    $region38: #{attention_refinement_nhwc.1} parent=5 // pred_check_branch
      %227 = sbr.rel (%p225) target = $region40
    $region39: #{attention_refinement_nhwc.1} parent=5 // pred_region
      // Predicated region
      $region41: #{attention_refinement_nhwc.1} parent=39 // pred_check
        %p228 = pneg %p33
      $region42: #{attention_refinement_nhwc.1} parent=39 // pred_check_branch
        %230 = sbr.rel (%p228) target = $region44
      $region43: #{attention_refinement_nhwc.1} parent=39 // pred_region
        %p231 = scmp.lt.s32.totalorder %s13, 1
        %s232 = scalar_select %p231, %s13, 1
        %s233 = smul.addr %s232, 32
        %s234 = smul.addr %s233, 4
        %s235 = scalar_lea.vmem %s0, %s234
      $region44: #{attention_refinement_nhwc.1} parent=39 // pred_fallthru
        _
    $region40: #{attention_refinement_nhwc.1} parent=5 // pred_fallthru
      _
    %p236 = scmp.le.s32.totalorder 1, %s13
    %p237 = scmp.lt.s32.totalorder %s13, 3
    %p238 = pnand %p236, %p237
    %p239 = pneg %p238
    // Predicated region
    $region45: #{attention_refinement_nhwc.1} parent=5 // pred_check
      _
    $region46: #{attention_refinement_nhwc.1} parent=5 // pred_check_branch
      %241 = sbr.rel (%p238) target = $region48
    $region47: #{attention_refinement_nhwc.1} parent=5 // pred_region
      %s242 = ssub.s32 %s13, 1
      %p243 = scmp.lt.s32.totalorder %s18, 1
      %s244 = scalar_select %p243, %s18, 1
      %s245 = smul.addr %s244, 32
      %s246 = smul.addr %s245, 4
      %s247 = scalar_lea.vmem %s0, %s246
      %p248 = pneg %p39
      %p249 = pneg %p36
      %p250 = pneg %p60
      %p251 = pneg %p57
      %p252 = pneg %p81
      %p253 = pneg %p78
      %p254 = pneg %p102
      %p255 = pneg %p99
      %p256 = pneg %p123
      %p257 = pneg %p120
      %p258 = pneg %p144
      %p259 = pneg %p141
      %p260 = pneg %p165
      %p261 = pneg %p162
      %p262 = pneg %p191
      %p263 = pneg %p188
      %p264 = scmp.lt.s32.totalorder %s18, 1
      %s265 = scalar_select %p264, %s18, 1
      %s266 = smul.addr %s265, 32
      %s267 = smul.addr %s266, 8
      %s268 = scalar_lea.vmem %s7, %s267
      %p269 = scmp.lt.s32.totalorder %s18, 1
      %s270 = scalar_select %p269, %s18, 1
      %s271 = smul.addr %s270, 32
      %s272 = smul.addr %s271, 4
      %s273 = scalar_lea.vmem %s0, %s272
      %p274 = scmp.lt.s32.totalorder %s18, 1
      %s275 = scalar_select %p274, %s18, 1
      %s276 = smul.addr %s275, 32
      %s277 = smul.addr %s276, 8
      %s278 = scalar_lea.vmem %s7, %s277
      %v280 = vld [vmem:[%s273] sm:$0xf]
      %v281 = vld [vmem:[%s273 + $0x4] sm:$0xf]
      %v282 = vld [vmem:[%s273 + $0x8] sm:$0xf]
      %v283 = vld [vmem:[%s273 + $0xc] sm:$0xf]
      %v284 = vld [vmem:[%s273 + $0x10] sm:$0xf]
      %v285 = vld [vmem:[%s273 + $0x14] sm:$0xf]
      %v286 = vld [vmem:[%s273 + $0x18] sm:$0xf]
      %v287 = vld [vmem:[%s273 + $0x1c] sm:$0xf]
      %v288 = vld [vmem:[%s273 + $0x20] sm:$0xf]
      %v289 = vld [vmem:[%s273 + $0x24] sm:$0xf]
      %v290 = vld [vmem:[%s273 + $0x28] sm:$0xf]
      %v291 = vld [vmem:[%s273 + $0x2c] sm:$0xf]
      %v292 = vld [vmem:[%s273 + $0x30] sm:$0xf]
      %v293 = vld [vmem:[%s273 + $0x34] sm:$0xf]
      %v294 = vld [vmem:[%s273 + $0x38] sm:$0xf]
      %v295 = vld [vmem:[%s273 + $0x3c] sm:$0xf]
      %v296 = vld [vmem:[%s273 + $0x40] sm:$0xf]
      %v297 = vld [vmem:[%s273 + $0x44] sm:$0xf]
      %v298 = vld [vmem:[%s273 + $0x48] sm:$0xf]
      %v299 = vld [vmem:[%s273 + $0x4c] sm:$0xf]
      %v300 = vld [vmem:[%s273 + $0x50] sm:$0xf]
      %v301 = vld [vmem:[%s273 + $0x54] sm:$0xf]
      %v302 = vld [vmem:[%s273 + $0x58] sm:$0xf]
      %v303 = vld [vmem:[%s273 + $0x5c] sm:$0xf]
      %v304 = vld [vmem:[%s273 + $0x60] sm:$0xf]
      %v305 = vld [vmem:[%s273 + $0x64] sm:$0xf]
      %v306 = vld [vmem:[%s273 + $0x68] sm:$0xf]
      %v307 = vld [vmem:[%s273 + $0x6c] sm:$0xf]
      %v308 = vld [vmem:[%s273 + $0x70] sm:$0xf]
      %v309 = vld [vmem:[%s273 + $0x74] sm:$0xf]
      %v310 = vld [vmem:[%s273 + $0x78] sm:$0xf]
      %v311 = vld [vmem:[%s273 + $0x7c] sm:$0xf]
      %v344 = vunpack.c.l.b16 %v280
      %v345 = vunpack.c.l.b16 %v281
      %v346 = vunpack.c.l.b16 %v282
      %v347 = vunpack.c.l.b16 %v283
      %v348 = vunpack.c.l.b16 %v284
      %v349 = vunpack.c.l.b16 %v285
      %v350 = vunpack.c.l.b16 %v286
      %v351 = vunpack.c.l.b16 %v287
      %v352 = vunpack.c.l.b16 %v288
      %v353 = vunpack.c.l.b16 %v289
      %v354 = vunpack.c.l.b16 %v290
      %v355 = vunpack.c.l.b16 %v291
      %v356 = vunpack.c.l.b16 %v292
      %v357 = vunpack.c.l.b16 %v293
      %v358 = vunpack.c.l.b16 %v294
      %v359 = vunpack.c.l.b16 %v295
      %v360 = vunpack.c.l.b16 %v296
      %v361 = vunpack.c.l.b16 %v297
      %v362 = vunpack.c.l.b16 %v298
      %v363 = vunpack.c.l.b16 %v299
      %v364 = vunpack.c.l.b16 %v300
      %v365 = vunpack.c.l.b16 %v301
      %v366 = vunpack.c.l.b16 %v302
      %v367 = vunpack.c.l.b16 %v303
      %v368 = vunpack.c.l.b16 %v304
      %v369 = vunpack.c.l.b16 %v305
      %v370 = vunpack.c.l.b16 %v306
      %v371 = vunpack.c.l.b16 %v307
      %v372 = vunpack.c.l.b16 %v308
      %v373 = vunpack.c.l.b16 %v309
      %v374 = vunpack.c.l.b16 %v310
      %v375 = vunpack.c.l.b16 %v311
      %v376 = vpack.c.b16 %v345, %v344
      %v377 = vpack.c.b16 %v347, %v346
      %v378 = vpack.c.b16 %v349, %v348
      %v379 = vpack.c.b16 %v351, %v350
      %v380 = vpack.c.b16 %v353, %v352
      %v381 = vpack.c.b16 %v355, %v354
      %v382 = vpack.c.b16 %v357, %v356
      %v383 = vpack.c.b16 %v359, %v358
      %v384 = vpack.c.b16 %v361, %v360
      %v385 = vpack.c.b16 %v363, %v362
      %v386 = vpack.c.b16 %v365, %v364
      %v387 = vpack.c.b16 %v367, %v366
      %v388 = vpack.c.b16 %v369, %v368
      %v389 = vpack.c.b16 %v371, %v370
      %v390 = vpack.c.b16 %v373, %v372
      %v391 = vpack.c.b16 %v375, %v374
      %v393 = vshrl.u32 %v376, 16
      %v395 = vrot.slane %v393, 7
      %v396 = vshll.u32 %v376, 16
      %v398 = vor.u32 %v395, %v396
      %v400 = vshrl.u32 %v377, 16
      %v402 = vrot.slane %v400, 7
      %v403 = vshll.u32 %v377, 16
      %v405 = vor.u32 %v402, %v403
      %v407 = vshrl.u32 %v378, 16
      %v409 = vrot.slane %v407, 7
      %v410 = vshll.u32 %v378, 16
      %v412 = vor.u32 %v409, %v410
      %v414 = vshrl.u32 %v379, 16
      %v416 = vrot.slane %v414, 7
      %v417 = vshll.u32 %v379, 16
      %v419 = vor.u32 %v416, %v417
      %v421 = vshrl.u32 %v380, 16
      %v423 = vrot.slane %v421, 7
      %v424 = vshll.u32 %v380, 16
      %v426 = vor.u32 %v423, %v424
      %v428 = vshrl.u32 %v381, 16
      %v430 = vrot.slane %v428, 7
      %v431 = vshll.u32 %v381, 16
      %v433 = vor.u32 %v430, %v431
      %v435 = vshrl.u32 %v382, 16
      %v437 = vrot.slane %v435, 7
      %v438 = vshll.u32 %v382, 16
      %v440 = vor.u32 %v437, %v438
      %v442 = vshrl.u32 %v383, 16
      %v444 = vrot.slane %v442, 7
      %v445 = vshll.u32 %v383, 16
      %v447 = vor.u32 %v444, %v445
      %v449 = vshrl.u32 %v384, 16
      %v451 = vrot.slane %v449, 7
      %v452 = vshll.u32 %v384, 16
      %v454 = vor.u32 %v451, %v452
      %v456 = vshrl.u32 %v385, 16
      %v458 = vrot.slane %v456, 7
      %v459 = vshll.u32 %v385, 16
      %v461 = vor.u32 %v458, %v459
      %v463 = vshrl.u32 %v386, 16
      %v465 = vrot.slane %v463, 7
      %v466 = vshll.u32 %v386, 16
      %v468 = vor.u32 %v465, %v466
      %v470 = vshrl.u32 %v387, 16
      %v472 = vrot.slane %v470, 7
      %v473 = vshll.u32 %v387, 16
      %v475 = vor.u32 %v472, %v473
      %v477 = vshrl.u32 %v388, 16
      %v479 = vrot.slane %v477, 7
      %v480 = vshll.u32 %v388, 16
      %v482 = vor.u32 %v479, %v480
      %v484 = vshrl.u32 %v389, 16
      %v486 = vrot.slane %v484, 7
      %v487 = vshll.u32 %v389, 16
      %v489 = vor.u32 %v486, %v487
      %v491 = vshrl.u32 %v390, 16
      %v493 = vrot.slane %v491, 7
      %v494 = vshll.u32 %v390, 16
      %v496 = vor.u32 %v493, %v494
      %v498 = vshrl.u32 %v391, 16
      %v500 = vrot.slane %v498, 7
      %v501 = vshll.u32 %v391, 16
      %v503 = vor.u32 %v500, %v501
      %vm520 = vcmask 1040384
      %vm521 = vsmask.f32 256
      %vm522 = vmand %vm520, %vm521
      %v523 = vsel %vm522, 0, %v398
      %v524 = vsel %vm522, 0, %v405
      %v525 = vsel %vm522, 0, %v412
      %v526 = vsel %vm522, 0, %v419
      %v527 = vsel %vm522, 0, %v426
      %v528 = vsel %vm522, 0, %v433
      %v529 = vsel %vm522, 0, %v440
      %v530 = vsel %vm522, 0, %v447
      %v531 = vsel %vm522, 0, %v454
      %v532 = vsel %vm522, 0, %v461
      %v533 = vsel %vm522, 0, %v468
      %v534 = vsel %vm522, 0, %v475
      %v535 = vsel %vm522, 0, %v482
      %v536 = vsel %vm522, 0, %v489
      %v537 = vsel %vm522, 0, %v496
      %v538 = vsel %vm522, 0, %v503
      %v539 = vrot.slane %v396, 1
      %v540 = vor.u32 %v393, %v539
      %v541 = vrot.slane %v403, 1
      %v542 = vor.u32 %v400, %v541
      %v543 = vrot.slane %v410, 1
      %v544 = vor.u32 %v407, %v543
      %v545 = vrot.slane %v417, 1
      %v546 = vor.u32 %v414, %v545
      %v547 = vrot.slane %v424, 1
      %v548 = vor.u32 %v421, %v547
      %v549 = vrot.slane %v431, 1
      %v550 = vor.u32 %v428, %v549
      %v551 = vrot.slane %v438, 1
      %v552 = vor.u32 %v435, %v551
      %v553 = vrot.slane %v445, 1
      %v554 = vor.u32 %v442, %v553
      %v555 = vrot.slane %v452, 1
      %v556 = vor.u32 %v449, %v555
      %v557 = vrot.slane %v459, 1
      %v558 = vor.u32 %v456, %v557
      %v559 = vrot.slane %v466, 1
      %v560 = vor.u32 %v463, %v559
      %v561 = vrot.slane %v473, 1
      %v562 = vor.u32 %v470, %v561
      %v563 = vrot.slane %v480, 1
      %v564 = vor.u32 %v477, %v563
      %v565 = vrot.slane %v487, 1
      %v566 = vor.u32 %v484, %v565
      %v567 = vrot.slane %v494, 1
      %v568 = vor.u32 %v491, %v567
      %v569 = vrot.slane %v501, 1
      %v570 = vor.u32 %v498, %v569
      %vm587 = vcmask 1047552
      %vm588 = vsmask.f32 7424
      %vm589 = vmand %vm587, %vm588
      %v590 = vsel %vm589, %v540, 0
      %v591 = vsel %vm589, %v542, 0
      %v592 = vsel %vm589, %v544, 0
      %v593 = vsel %vm589, %v546, 0
      %v594 = vsel %vm589, %v548, 0
      %v595 = vsel %vm589, %v550, 0
      %v596 = vsel %vm589, %v552, 0
      %v597 = vsel %vm589, %v554, 0
      %v598 = vsel %vm589, %v556, 0
      %v599 = vsel %vm589, %v558, 0
      %v600 = vsel %vm589, %v560, 0
      %v601 = vsel %vm589, %v562, 0
      %v602 = vsel %vm589, %v564, 0
      %v603 = vsel %vm589, %v566, 0
      %v604 = vsel %vm589, %v568, 0
      %v605 = vsel %vm589, %v570, 0
      %v622 = vld [vmem:[%s1] sm:$0xf]
      %v623 = vld [vmem:[%s1 + $0x4] sm:$0xf]
      %v624 = vld [vmem:[%s1 + $0x8] sm:$0xf]
      %v625 = vld [vmem:[%s1 + $0xc] sm:$0xf]
      %v626 = vld [vmem:[%s1 + $0x10] sm:$0xf]
      %v627 = vld [vmem:[%s1 + $0x14] sm:$0xf]
      %v628 = vld [vmem:[%s1 + $0x18] sm:$0xf]
      %v629 = vld [vmem:[%s1 + $0x1c] sm:$0xf]
      %v630 = vld [vmem:[%s1 + $0x20] sm:$0xf]
      %v631 = vld [vmem:[%s1 + $0x24] sm:$0xf]
      %v632 = vld [vmem:[%s1 + $0x28] sm:$0xf]
      %v633 = vld [vmem:[%s1 + $0x2c] sm:$0xf]
      %v634 = vld [vmem:[%s1 + $0x30] sm:$0xf]
      %v635 = vld [vmem:[%s1 + $0x34] sm:$0xf]
      %v636 = vld [vmem:[%s1 + $0x38] sm:$0xf]
      %v637 = vld [vmem:[%s1 + $0x3c] sm:$0xf]
      %v638 = vld [vmem:[%s1 + $0x40] sm:$0xf]
      %v639 = vld [vmem:[%s1 + $0x44] sm:$0xf]
      %v640 = vld [vmem:[%s1 + $0x48] sm:$0xf]
      %v641 = vld [vmem:[%s1 + $0x4c] sm:$0xf]
      %v642 = vld [vmem:[%s1 + $0x50] sm:$0xf]
      %v643 = vld [vmem:[%s1 + $0x54] sm:$0xf]
      %v644 = vld [vmem:[%s1 + $0x58] sm:$0xf]
      %v645 = vld [vmem:[%s1 + $0x5c] sm:$0xf]
      %v646 = vld [vmem:[%s1 + $0x60] sm:$0xf]
      %v647 = vld [vmem:[%s1 + $0x64] sm:$0xf]
      %v648 = vld [vmem:[%s1 + $0x68] sm:$0xf]
      %v649 = vld [vmem:[%s1 + $0x6c] sm:$0xf]
      %v650 = vld [vmem:[%s1 + $0x70] sm:$0xf]
      %v651 = vld [vmem:[%s1 + $0x74] sm:$0xf]
      %v652 = vld [vmem:[%s1 + $0x78] sm:$0xf]
      %v653 = vld [vmem:[%s1 + $0x7c] sm:$0xf]
      %v654 = vld [vmem:[%s1 + $0x80] sm:$0xf]
      %v655 = vld [vmem:[%s1 + $0x84] sm:$0xf]
      %v656 = vld [vmem:[%s1 + $0x88] sm:$0xf]
      %v657 = vld [vmem:[%s1 + $0x8c] sm:$0xf]
      %v658 = vld [vmem:[%s1 + $0x90] sm:$0xf]
      %v659 = vld [vmem:[%s1 + $0x94] sm:$0xf]
      %v660 = vld [vmem:[%s1 + $0x98] sm:$0xf]
      %v661 = vld [vmem:[%s1 + $0x9c] sm:$0xf]
      %v662 = vld [vmem:[%s1 + $0xa0] sm:$0xf]
      %v663 = vld [vmem:[%s1 + $0xa4] sm:$0xf]
      %v664 = vld [vmem:[%s1 + $0xa8] sm:$0xf]
      %v665 = vld [vmem:[%s1 + $0xac] sm:$0xf]
      %v666 = vld [vmem:[%s1 + $0xb0] sm:$0xf]
      %v667 = vld [vmem:[%s1 + $0xb4] sm:$0xf]
      %v668 = vld [vmem:[%s1 + $0xb8] sm:$0xf]
      %v669 = vld [vmem:[%s1 + $0xbc] sm:$0xf]
      %v718 = vunpack.c.l.b16 %v622
      %v719 = vunpack.c.l.b16 %v623
      %v720 = vunpack.c.l.b16 %v624
      %v721 = vunpack.c.l.b16 %v625
      %v722 = vunpack.c.l.b16 %v626
      %v723 = vunpack.c.l.b16 %v627
      %v724 = vunpack.c.l.b16 %v628
      %v725 = vunpack.c.l.b16 %v629
      %v726 = vunpack.c.l.b16 %v630
      %v727 = vunpack.c.l.b16 %v631
      %v728 = vunpack.c.l.b16 %v632
      %v729 = vunpack.c.l.b16 %v633
      %v730 = vunpack.c.l.b16 %v634
      %v731 = vunpack.c.l.b16 %v635
      %v732 = vunpack.c.l.b16 %v636
      %v733 = vunpack.c.l.b16 %v637
      %v734 = vunpack.c.l.b16 %v638
      %v735 = vunpack.c.l.b16 %v639
      %v736 = vunpack.c.l.b16 %v640
      %v737 = vunpack.c.l.b16 %v641
      %v738 = vunpack.c.l.b16 %v642
      %v739 = vunpack.c.l.b16 %v643
      %v740 = vunpack.c.l.b16 %v644
      %v741 = vunpack.c.l.b16 %v645
      %v742 = vunpack.c.l.b16 %v646
      %v743 = vunpack.c.l.b16 %v647
      %v744 = vunpack.c.l.b16 %v648
      %v745 = vunpack.c.l.b16 %v649
      %v746 = vunpack.c.l.b16 %v650
      %v747 = vunpack.c.l.b16 %v651
      %v748 = vunpack.c.l.b16 %v652
      %v749 = vunpack.c.l.b16 %v653
      %v750 = vunpack.c.l.b16 %v654
      %v751 = vunpack.c.l.b16 %v655
      %v752 = vunpack.c.l.b16 %v656
      %v753 = vunpack.c.l.b16 %v657
      %v754 = vunpack.c.l.b16 %v658
      %v755 = vunpack.c.l.b16 %v659
      %v756 = vunpack.c.l.b16 %v660
      %v757 = vunpack.c.l.b16 %v661
      %v758 = vunpack.c.l.b16 %v662
      %v759 = vunpack.c.l.b16 %v663
      %v760 = vunpack.c.l.b16 %v664
      %v761 = vunpack.c.l.b16 %v665
      %v762 = vunpack.c.l.b16 %v666
      %v763 = vunpack.c.l.b16 %v667
      %v764 = vunpack.c.l.b16 %v668
      %v765 = vunpack.c.l.b16 %v669
      %v766 = vpack.c.b16 %v719, %v718
      %v767 = vpack.c.b16 %v721, %v720
      %v768 = vpack.c.b16 %v723, %v722
      %v769 = vpack.c.b16 %v725, %v724
      %v770 = vpack.c.b16 %v727, %v726
      %v771 = vpack.c.b16 %v729, %v728
      %v772 = vpack.c.b16 %v731, %v730
      %v773 = vpack.c.b16 %v733, %v732
      %v774 = vpack.c.b16 %v735, %v734
      %v775 = vpack.c.b16 %v737, %v736
      %v776 = vpack.c.b16 %v739, %v738
      %v777 = vpack.c.b16 %v741, %v740
      %v778 = vpack.c.b16 %v743, %v742
      %v779 = vpack.c.b16 %v745, %v744
      %v780 = vpack.c.b16 %v747, %v746
      %v781 = vpack.c.b16 %v749, %v748
      %v782 = vpack.c.b16 %v751, %v750
      %v783 = vpack.c.b16 %v753, %v752
      %v784 = vpack.c.b16 %v755, %v754
      %v785 = vpack.c.b16 %v757, %v756
      %v786 = vpack.c.b16 %v759, %v758
      %v787 = vpack.c.b16 %v761, %v760
      %v788 = vpack.c.b16 %v763, %v762
      %v789 = vpack.c.b16 %v765, %v764
      %814 = vmatprep.subr.bf16.mxu0 0
      %815 = vmatpush1.bf16.msra.mxu0 %v766
      %816 = vmatprep.subr.bf16.mxu0 0
      %817 = vmatpush1.bf16.msra.mxu0 %v767
      %818 = vmatprep.subr.bf16.mxu0 0
      %819 = vmatpush1.bf16.msra.mxu0 %v768
      %820 = vmatprep.subr.bf16.mxu0 0
      %821 = vmatpush1.bf16.msra.mxu0 %v769
      %822 = vmatprep.subr.bf16.mxu0 0
      %823 = vmatpush1.bf16.msra.mxu0 %v770
      %824 = vmatprep.subr.bf16.mxu0 0
      %825 = vmatpush1.bf16.msra.mxu0 %v771
      %826 = vmatprep.subr.bf16.mxu0 0
      %827 = vmatpush1.bf16.msra.mxu0 %v772
      %828 = vmatprep.subr.bf16.mxu0 0
      %829 = vmatpush1.bf16.msra.mxu0 %v773
      %830 = vmatprep.subr.bf16.mxu0 0
      %831 = vmatpush1.bf16.msra.mxu0 %v774
      %832 = vmatprep.subr.bf16.mxu0 0
      %833 = vmatpush1.bf16.msra.mxu0 %v775
      %834 = vmatprep.subr.bf16.mxu0 0
      %835 = vmatpush1.bf16.msra.mxu0 %v776
      %836 = vmatprep.subr.bf16.mxu0 0
      %837 = vmatpush1.bf16.msra.mxu0 %v777
      %838 = vmatprep.subr.bf16.mxu0 0
      %839 = vmatpush1.bf16.msra.mxu0 %v778
      %840 = vmatprep.subr.bf16.mxu0 0
      %841 = vmatpush1.bf16.msra.mxu0 %v779
      %842 = vmatprep.subr.bf16.mxu0 0
      %843 = vmatpush1.bf16.msra.mxu0 %v780
      %844 = vmatprep.subr.bf16.mxu0 0
      %845 = vmatpush1.bf16.msra.mxu0 %v781
      %846 = vmatprep.mubr.bf16.mxu0 0
      %847 = vmatmul.mubr.bf16.gmra.mrb[0].mxu0 0
      %v848 = vpop.f32.mrb[0].mxu0
      %v849 = vadd.f32 0.0, %v848
      %v850 = vpop.f32.mrb[0].mxu0
      %v851 = vpop.f32.mrb[0].mxu0
      %v852 = vadd.f32 0.0, %v851
      %v853 = vpop.f32.mrb[0].mxu0
      %854 = vmatprep.mubr.bf16.mxu0 %v376
      %855 = vmatmul.mubr.bf16.gmra.mrb[0].mxu0 %v523
      %v856 = vpop.f32.mrb[0].mxu0
      %v857 = vadd.f32 0.0, %v856
      %v858 = vpop.f32.mrb[0].mxu0
      %v859 = vpop.f32.mrb[0].mxu0
      %v860 = vadd.f32 0.0, %v859
      %v861 = vpop.f32.mrb[0].mxu0
      %862 = vmatprep.mubr.bf16.mxu0 %v377
      %863 = vmatmul.mubr.bf16.gmra.mrb[0].mxu0 %v524
      %v864 = vpop.f32.mrb[0].mxu0
      %v865 = vadd.f32 0.0, %v864
      %v866 = vpop.f32.mrb[0].mxu0
      %v867 = vpop.f32.mrb[0].mxu0
      %v868 = vadd.f32 0.0, %v867
      %v869 = vpop.f32.mrb[0].mxu0
      %870 = vmatprep.mubr.bf16.mxu0 %v378
      %871 = vmatmul.mubr.bf16.gmra.mrb[0].mxu0 %v525
      %v872 = vpop.f32.mrb[0].mxu0
      %v873 = vadd.f32 0.0, %v872
      %v874 = vpop.f32.mrb[0].mxu0
      %v875 = vpop.f32.mrb[0].mxu0
      %v876 = vadd.f32 0.0, %v875
      %v877 = vpop.f32.mrb[0].mxu0
      %878 = vmatprep.mubr.bf16.mxu0 %v379
      %879 = vmatmul.mubr.bf16.gmra.mrb[0].mxu0 %v526
      %v880 = vpop.f32.mrb[0].mxu0
      %v881 = vadd.f32 0.0, %v880
      %v882 = vpop.f32.mrb[0].mxu0
      %v883 = vpop.f32.mrb[0].mxu0
      %v884 = vadd.f32 0.0, %v883
      %v885 = vpop.f32.mrb[0].mxu0
      %886 = vmatprep.mubr.bf16.mxu0 %v380
      %887 = vmatmul.mubr.bf16.gmra.mrb[0].mxu0 %v527
      %v888 = vpop.f32.mrb[0].mxu0
      %v889 = vadd.f32 0.0, %v888
      %v890 = vpop.f32.mrb[0].mxu0
      %v891 = vpop.f32.mrb[0].mxu0
      %v892 = vadd.f32 0.0, %v891
      %v893 = vpop.f32.mrb[0].mxu0
      %894 = vmatprep.mubr.bf16.mxu0 %v381
      %895 = vmatmul.mubr.bf16.gmra.mrb[0].mxu0 %v528
      %v896 = vpop.f32.mrb[0].mxu0
      %v897 = vadd.f32 0.0, %v896
      %v898 = vpop.f32.mrb[0].mxu0
      %v899 = vpop.f32.mrb[0].mxu0
      %v900 = vadd.f32 0.0, %v899
      %v901 = vpop.f32.mrb[0].mxu0
      %902 = vmatprep.mubr.bf16.mxu0 %v382
      %903 = vmatmul.mubr.bf16.gmra.mrb[0].mxu0 %v529
      %v904 = vpop.f32.mrb[0].mxu0
      %v905 = vadd.f32 0.0, %v904
      %v906 = vpop.f32.mrb[0].mxu0
      %v907 = vpop.f32.mrb[0].mxu0
      %v908 = vadd.f32 0.0, %v907
      %v909 = vpop.f32.mrb[0].mxu0
      %910 = vmatprep.mubr.bf16.mxu0 %v383
      %911 = vmatmul.mubr.bf16.gmra.mrb[0].mxu0 %v530
      %v912 = vpop.f32.mrb[0].mxu0
      %v913 = vadd.f32 0.0, %v912
      %v914 = vpop.f32.mrb[0].mxu0
      %v915 = vpop.f32.mrb[0].mxu0
      %v916 = vadd.f32 0.0, %v915
      %v917 = vpop.f32.mrb[0].mxu0
      %918 = vmatprep.mubr.bf16.mxu0 %v384
      %919 = vmatmul.mubr.bf16.gmra.mrb[0].mxu0 %v531
      %v920 = vpop.f32.mrb[0].mxu0
      %v921 = vadd.f32 0.0, %v920
      %v922 = vpop.f32.mrb[0].mxu0
      %v923 = vpop.f32.mrb[0].mxu0
      %v924 = vadd.f32 0.0, %v923
      %v925 = vpop.f32.mrb[0].mxu0
      %926 = vmatprep.mubr.bf16.mxu0 %v385
      %927 = vmatmul.mubr.bf16.gmra.mrb[0].mxu0 %v532
      %v928 = vpop.f32.mrb[0].mxu0
      %v929 = vadd.f32 0.0, %v928
      %v930 = vpop.f32.mrb[0].mxu0
      %v931 = vpop.f32.mrb[0].mxu0
      %v932 = vadd.f32 0.0, %v931
      %v933 = vpop.f32.mrb[0].mxu0
      %934 = vmatprep.mubr.bf16.mxu0 %v386
      %935 = vmatmul.mubr.bf16.gmra.mrb[0].mxu0 %v533
      %v936 = vpop.f32.mrb[0].mxu0
      %v937 = vadd.f32 0.0, %v936
      %v938 = vpop.f32.mrb[0].mxu0
      %v939 = vpop.f32.mrb[0].mxu0
      %v940 = vadd.f32 0.0, %v939
      %v941 = vpop.f32.mrb[0].mxu0
      %942 = vmatprep.mubr.bf16.mxu0 %v387
      %943 = vmatmul.mubr.bf16.gmra.mrb[0].mxu0 %v534
      %v944 = vpop.f32.mrb[0].mxu0
      %v945 = vadd.f32 0.0, %v944
      %v946 = vpop.f32.mrb[0].mxu0
      %v947 = vpop.f32.mrb[0].mxu0
      %v948 = vadd.f32 0.0, %v947
      %v949 = vpop.f32.mrb[0].mxu0
      %950 = vmatprep.mubr.bf16.mxu0 %v388
      %951 = vmatmul.mubr.bf16.gmra.mrb[0].mxu0 %v535
      %v952 = vpop.f32.mrb[0].mxu0
      %v953 = vadd.f32 0.0, %v952
      %v954 = vpop.f32.mrb[0].mxu0
      %v955 = vpop.f32.mrb[0].mxu0
      %v956 = vadd.f32 0.0, %v955
      %v957 = vpop.f32.mrb[0].mxu0
      %958 = vmatprep.mubr.bf16.mxu0 %v389
      %959 = vmatmul.mubr.bf16.gmra.mrb[0].mxu0 %v536
      %v960 = vpop.f32.mrb[0].mxu0
      %v961 = vadd.f32 0.0, %v960
      %v962 = vpop.f32.mrb[0].mxu0
      %v963 = vpop.f32.mrb[0].mxu0
      %v964 = vadd.f32 0.0, %v963
      %v965 = vpop.f32.mrb[0].mxu0
      %966 = vmatprep.mubr.bf16.mxu0 %v390
      %967 = vmatmul.mubr.bf16.gmra.mrb[0].mxu0 %v537
      %v968 = vpop.f32.mrb[0].mxu0
      %v969 = vadd.f32 0.0, %v968
      %v970 = vpop.f32.mrb[0].mxu0
      %v971 = vpop.f32.mrb[0].mxu0
      %v972 = vadd.f32 0.0, %v971
      %v973 = vpop.f32.mrb[0].mxu0
      %974 = vdwg.mxu0
      %975 = vmatprep.subr.bf16.mxu0 0
      %976 = vmatpush1.bf16.msra.mxu0 %v782
      %977 = vmatprep.subr.bf16.mxu0 0
      %978 = vmatpush1.bf16.msra.mxu0 %v783
      %979 = vmatprep.subr.bf16.mxu0 0
      %980 = vmatpush1.bf16.msra.mxu0 %v784
      %981 = vmatprep.subr.bf16.mxu0 0
      %982 = vmatpush1.bf16.msra.mxu0 %v785
      %983 = vmatprep.subr.bf16.mxu0 0
      %984 = vmatpush1.bf16.msra.mxu0 %v786
      %985 = vmatprep.subr.bf16.mxu0 0
      %986 = vmatpush1.bf16.msra.mxu0 %v787
      %987 = vmatprep.subr.bf16.mxu0 0
      %988 = vmatpush1.bf16.msra.mxu0 %v788
      %989 = vmatprep.subr.bf16.mxu0 0
      %990 = vmatpush1.bf16.msra.mxu0 %v789
      %991 = vmatprep.subr.bf16.mxu0 0
      %992 = vmatpush1.bf16.msra.mxu0 0
      %993 = vmatprep.subr.bf16.mxu0 0
      %994 = vmatpush1.bf16.msra.mxu0 0
      %995 = vmatprep.subr.bf16.mxu0 0
      %996 = vmatpush1.bf16.msra.mxu0 0
      %997 = vmatprep.subr.bf16.mxu0 0
      %998 = vmatpush1.bf16.msra.mxu0 0
      %999 = vmatprep.subr.bf16.mxu0 0
      %1000 = vmatpush1.bf16.msra.mxu0 0
      %1001 = vmatprep.subr.bf16.mxu0 0
      %1002 = vmatpush1.bf16.msra.mxu0 0
      %1003 = vmatprep.subr.bf16.mxu0 0
      %1004 = vmatpush1.bf16.msra.mxu0 0
      %1005 = vmatprep.subr.bf16.mxu0 0
      %1006 = vmatpush1.bf16.msra.mxu0 0
      %1007 = vmatprep.mubr.bf16.mxu0 0
      %1008 = vmatmul.mubr.bf16.gmra.mrb[0].mxu0 0
      %v1009 = vpop.f32.mrb[0].mxu0
      %v1010 = vadd.f32 %v849, %v1009
      %v1011 = vpop.f32.mrb[0].mxu0
      %v1012 = vpop.f32.mrb[0].mxu0
      %v1013 = vadd.f32 %v852, %v1012
      %v1014 = vpop.f32.mrb[0].mxu0
      %1015 = vmatprep.mubr.bf16.mxu0 0
      %1016 = vmatmul.mubr.bf16.gmra.mrb[0].mxu0 %v590
      %v1017 = vpop.f32.mrb[0].mxu0
      %v1018 = vadd.f32 %v857, %v1017
      %v1019 = vpop.f32.mrb[0].mxu0
      %v1020 = vpop.f32.mrb[0].mxu0
      %v1021 = vadd.f32 %v860, %v1020
      %v1022 = vpop.f32.mrb[0].mxu0
      %1023 = vmatprep.mubr.bf16.mxu0 0
      %1024 = vmatmul.mubr.bf16.gmra.mrb[0].mxu0 %v591
      %v1025 = vpop.f32.mrb[0].mxu0
      %v1026 = vadd.f32 %v865, %v1025
      %v1027 = vpop.f32.mrb[0].mxu0
      %v1028 = vpop.f32.mrb[0].mxu0
      %v1029 = vadd.f32 %v868, %v1028
      %v1030 = vpop.f32.mrb[0].mxu0
      %1031 = vmatprep.mubr.bf16.mxu0 0
      %1032 = vmatmul.mubr.bf16.gmra.mrb[0].mxu0 %v592
      %v1033 = vpop.f32.mrb[0].mxu0
      %v1034 = vadd.f32 %v873, %v1033
      %v1035 = vpop.f32.mrb[0].mxu0
      %v1036 = vpop.f32.mrb[0].mxu0
      %v1037 = vadd.f32 %v876, %v1036
      %v1038 = vpop.f32.mrb[0].mxu0
      %1039 = vmatprep.mubr.bf16.mxu0 0
      %1040 = vmatmul.mubr.bf16.gmra.mrb[0].mxu0 %v593
      %v1041 = vpop.f32.mrb[0].mxu0
      %v1042 = vadd.f32 %v881, %v1041
      %v1043 = vpop.f32.mrb[0].mxu0
      %v1044 = vpop.f32.mrb[0].mxu0
      %v1045 = vadd.f32 %v884, %v1044
      %v1046 = vpop.f32.mrb[0].mxu0
      %1047 = vmatprep.mubr.bf16.mxu0 0
      %1048 = vmatmul.mubr.bf16.gmra.mrb[0].mxu0 %v594
      %v1049 = vpop.f32.mrb[0].mxu0
      %v1050 = vadd.f32 %v889, %v1049
      %v1051 = vpop.f32.mrb[0].mxu0
      %v1052 = vpop.f32.mrb[0].mxu0
      %v1053 = vadd.f32 %v892, %v1052
      %v1054 = vpop.f32.mrb[0].mxu0
      %1055 = vmatprep.mubr.bf16.mxu0 0
      %1056 = vmatmul.mubr.bf16.gmra.mrb[0].mxu0 %v595
      %v1057 = vpop.f32.mrb[0].mxu0
      %v1058 = vadd.f32 %v897, %v1057
      %v1059 = vpop.f32.mrb[0].mxu0
      %v1060 = vpop.f32.mrb[0].mxu0
      %v1061 = vadd.f32 %v900, %v1060
      %v1062 = vpop.f32.mrb[0].mxu0
      %1063 = vmatprep.mubr.bf16.mxu0 0
      %1064 = vmatmul.mubr.bf16.gmra.mrb[0].mxu0 %v596
      %v1065 = vpop.f32.mrb[0].mxu0
      %v1066 = vadd.f32 %v905, %v1065
      %v1067 = vpop.f32.mrb[0].mxu0
      %v1068 = vpop.f32.mrb[0].mxu0
      %v1069 = vadd.f32 %v908, %v1068
      %v1070 = vpop.f32.mrb[0].mxu0
      %1071 = vmatprep.mubr.bf16.mxu0 0
      %1072 = vmatmul.mubr.bf16.gmra.mrb[0].mxu0 %v597
      %v1073 = vpop.f32.mrb[0].mxu0
      %v1074 = vadd.f32 %v913, %v1073
      %v1075 = vpop.f32.mrb[0].mxu0
      %v1076 = vpop.f32.mrb[0].mxu0
      %v1077 = vadd.f32 %v916, %v1076
      %v1078 = vpop.f32.mrb[0].mxu0
      %1079 = vmatprep.mubr.bf16.mxu0 0
      %1080 = vmatmul.mubr.bf16.gmra.mrb[0].mxu0 %v598
      %v1081 = vpop.f32.mrb[0].mxu0
      %v1082 = vadd.f32 %v921, %v1081
      %v1083 = vpop.f32.mrb[0].mxu0
      %v1084 = vpop.f32.mrb[0].mxu0
      %v1085 = vadd.f32 %v924, %v1084
      %v1086 = vpop.f32.mrb[0].mxu0
      %1087 = vmatprep.mubr.bf16.mxu0 0
      %1088 = vmatmul.mubr.bf16.gmra.mrb[0].mxu0 %v599
      %v1089 = vpop.f32.mrb[0].mxu0
      %v1090 = vadd.f32 %v929, %v1089
      %v1091 = vpop.f32.mrb[0].mxu0
      %v1092 = vpop.f32.mrb[0].mxu0
      %v1093 = vadd.f32 %v932, %v1092
      %v1094 = vpop.f32.mrb[0].mxu0
      %1095 = vmatprep.mubr.bf16.mxu0 0
      %1096 = vmatmul.mubr.bf16.gmra.mrb[0].mxu0 %v600
      %v1097 = vpop.f32.mrb[0].mxu0
      %v1098 = vadd.f32 %v937, %v1097
      %v1099 = vpop.f32.mrb[0].mxu0
      %v1100 = vpop.f32.mrb[0].mxu0
      %v1101 = vadd.f32 %v940, %v1100
      %v1102 = vpop.f32.mrb[0].mxu0
      %1103 = vmatprep.mubr.bf16.mxu0 0
      %1104 = vmatmul.mubr.bf16.gmra.mrb[0].mxu0 %v601
      %v1105 = vpop.f32.mrb[0].mxu0
      %v1106 = vadd.f32 %v945, %v1105
      %v1107 = vpop.f32.mrb[0].mxu0
      %v1108 = vpop.f32.mrb[0].mxu0
      %v1109 = vadd.f32 %v948, %v1108
      %v1110 = vpop.f32.mrb[0].mxu0
      %1111 = vmatprep.mubr.bf16.mxu0 0
      %1112 = vmatmul.mubr.bf16.gmra.mrb[0].mxu0 %v602
      %v1113 = vpop.f32.mrb[0].mxu0
      %v1114 = vadd.f32 %v953, %v1113
      %v1115 = vpop.f32.mrb[0].mxu0
      %v1116 = vpop.f32.mrb[0].mxu0
      %v1117 = vadd.f32 %v956, %v1116
      %v1118 = vpop.f32.mrb[0].mxu0
      %1119 = vmatprep.mubr.bf16.mxu0 0
      %1120 = vmatmul.mubr.bf16.gmra.mrb[0].mxu0 %v603
      %v1121 = vpop.f32.mrb[0].mxu0
      %v1122 = vadd.f32 %v961, %v1121
      %v1123 = vpop.f32.mrb[0].mxu0
      %v1124 = vpop.f32.mrb[0].mxu0
      %v1125 = vadd.f32 %v964, %v1124
      %v1126 = vpop.f32.mrb[0].mxu0
      %1127 = vmatprep.mubr.bf16.mxu0 0
      %1128 = vmatmul.mubr.bf16.gmra.mrb[0].mxu0 %v604
      %v1129 = vpop.f32.mrb[0].mxu0
      %v1130 = vadd.f32 %v969, %v1129
      %v1131 = vpop.f32.mrb[0].mxu0
      %v1132 = vpop.f32.mrb[0].mxu0
      %v1133 = vadd.f32 %v972, %v1132
      %v1134 = vpop.f32.mrb[0].mxu0
      %1135 = vdwg.mxu0
      %1136 = vst [vmem:[#allocation2] sm:$0xff] %v1010
      %1137 = vst [vmem:[#allocation2 + $0x8] sm:$0xff] %v1013
      %1138 = vst [vmem:[#allocation2 + $0x10] sm:$0xff] %v1018
      %1139 = vst [vmem:[#allocation2 + $0x18] sm:$0xff] %v1021
      %1140 = vst [vmem:[#allocation2 + $0x20] sm:$0xff] %v1026
      %1141 = vst [vmem:[#allocation2 + $0x28] sm:$0xff] %v1029
      %1142 = vst [vmem:[#allocation2 + $0x30] sm:$0xff] %v1034
      %1143 = vst [vmem:[#allocation2 + $0x38] sm:$0xff] %v1037
      %1144 = vst [vmem:[#allocation2 + $0x40] sm:$0xff] %v1042
      %1145 = vst [vmem:[#allocation2 + $0x48] sm:$0xff] %v1045
      %1146 = vst [vmem:[#allocation2 + $0x50] sm:$0xff] %v1050
      %1147 = vst [vmem:[#allocation2 + $0x58] sm:$0xff] %v1053
      %1148 = vst [vmem:[#allocation2 + $0x60] sm:$0xff] %v1058
      %1149 = vst [vmem:[#allocation2 + $0x68] sm:$0xff] %v1061
      %1150 = vst [vmem:[#allocation2 + $0x70] sm:$0xff] %v1066
      %1151 = vst [vmem:[#allocation2 + $0x78] sm:$0xff] %v1069
      %1152 = vst [vmem:[#allocation2 + $0x80] sm:$0xff] %v1074
      %1153 = vst [vmem:[#allocation2 + $0x88] sm:$0xff] %v1077
      %1154 = vst [vmem:[#allocation2 + $0x90] sm:$0xff] %v1082
      %1155 = vst [vmem:[#allocation2 + $0x98] sm:$0xff] %v1085
      %1156 = vst [vmem:[#allocation2 + $0xa0] sm:$0xff] %v1090
      %1157 = vst [vmem:[#allocation2 + $0xa8] sm:$0xff] %v1093
      %1158 = vst [vmem:[#allocation2 + $0xb0] sm:$0xff] %v1098
      %1159 = vst [vmem:[#allocation2 + $0xb8] sm:$0xff] %v1101
      %1160 = vst [vmem:[#allocation2 + $0xc0] sm:$0xff] %v1106
      %1161 = vst [vmem:[#allocation2 + $0xc8] sm:$0xff] %v1109
      %1162 = vst [vmem:[#allocation2 + $0xd0] sm:$0xff] %v1114
      %1163 = vst [vmem:[#allocation2 + $0xd8] sm:$0xff] %v1117
      %1164 = vst [vmem:[#allocation2 + $0xe0] sm:$0xff] %v1122
      %1165 = vst [vmem:[#allocation2 + $0xe8] sm:$0xff] %v1125
      %1166 = vst [vmem:[#allocation2 + $0xf0] sm:$0xff] %v1130
      %1167 = vst [vmem:[#allocation2 + $0xf8] sm:$0xff] %v1133
      %s1168 = scalar_lea.vmem %s1, 192
      %v1169 = vld [vmem:[%s1168] sm:$0xf]
      %v1170 = vld [vmem:[%s1168 + $0x4] sm:$0xf]
      %v1171 = vld [vmem:[%s1168 + $0x8] sm:$0xf]
      %v1172 = vld [vmem:[%s1168 + $0xc] sm:$0xf]
      %v1173 = vld [vmem:[%s1168 + $0x10] sm:$0xf]
      %v1174 = vld [vmem:[%s1168 + $0x14] sm:$0xf]
      %v1175 = vld [vmem:[%s1168 + $0x18] sm:$0xf]
      %v1176 = vld [vmem:[%s1168 + $0x1c] sm:$0xf]
      %v1177 = vld [vmem:[%s1168 + $0x20] sm:$0xf]
      %v1178 = vld [vmem:[%s1168 + $0x24] sm:$0xf]
      %v1179 = vld [vmem:[%s1168 + $0x28] sm:$0xf]
      %v1180 = vld [vmem:[%s1168 + $0x2c] sm:$0xf]
      %v1181 = vld [vmem:[%s1168 + $0x30] sm:$0xf]
      %v1182 = vld [vmem:[%s1168 + $0x34] sm:$0xf]
      %v1183 = vld [vmem:[%s1168 + $0x38] sm:$0xf]
      %v1184 = vld [vmem:[%s1168 + $0x3c] sm:$0xf]
      %v1185 = vld [vmem:[%s1168 + $0x40] sm:$0xf]
      %v1186 = vld [vmem:[%s1168 + $0x44] sm:$0xf]
      %v1187 = vld [vmem:[%s1168 + $0x48] sm:$0xf]
      %v1188 = vld [vmem:[%s1168 + $0x4c] sm:$0xf]
      %v1189 = vld [vmem:[%s1168 + $0x50] sm:$0xf]
      %v1190 = vld [vmem:[%s1168 + $0x54] sm:$0xf]
      %v1191 = vld [vmem:[%s1168 + $0x58] sm:$0xf]
      %v1192 = vld [vmem:[%s1168 + $0x5c] sm:$0xf]
      %v1193 = vld [vmem:[%s1168 + $0x60] sm:$0xf]
      %v1194 = vld [vmem:[%s1168 + $0x64] sm:$0xf]
      %v1195 = vld [vmem:[%s1168 + $0x68] sm:$0xf]
      %v1196 = vld [vmem:[%s1168 + $0x6c] sm:$0xf]
      %v1197 = vld [vmem:[%s1168 + $0x70] sm:$0xf]
      %v1198 = vld [vmem:[%s1168 + $0x74] sm:$0xf]
      %v1199 = vld [vmem:[%s1168 + $0x78] sm:$0xf]
      %v1200 = vld [vmem:[%s1168 + $0x7c] sm:$0xf]
      %v1201 = vld [vmem:[%s1168 + $0x80] sm:$0xf]
      %v1202 = vld [vmem:[%s1168 + $0x84] sm:$0xf]
      %v1203 = vld [vmem:[%s1168 + $0x88] sm:$0xf]
      %v1204 = vld [vmem:[%s1168 + $0x8c] sm:$0xf]
      %v1205 = vld [vmem:[%s1168 + $0x90] sm:$0xf]
      %v1206 = vld [vmem:[%s1168 + $0x94] sm:$0xf]
      %v1207 = vld [vmem:[%s1168 + $0x98] sm:$0xf]
      %v1208 = vld [vmem:[%s1168 + $0x9c] sm:$0xf]
      %v1209 = vld [vmem:[%s1168 + $0xa0] sm:$0xf]
      %v1210 = vld [vmem:[%s1168 + $0xa4] sm:$0xf]
      %v1211 = vld [vmem:[%s1168 + $0xa8] sm:$0xf]
      %v1212 = vld [vmem:[%s1168 + $0xac] sm:$0xf]
      %v1213 = vld [vmem:[%s1168 + $0xb0] sm:$0xf]
      %v1214 = vld [vmem:[%s1168 + $0xb4] sm:$0xf]
      %v1215 = vld [vmem:[%s1168 + $0xb8] sm:$0xf]
      %v1216 = vld [vmem:[%s1168 + $0xbc] sm:$0xf]
      %v1265 = vunpack.c.l.b16 %v1169
      %v1266 = vunpack.c.l.b16 %v1170
      %v1267 = vunpack.c.l.b16 %v1171
      %v1268 = vunpack.c.l.b16 %v1172
      %v1269 = vunpack.c.l.b16 %v1173
      %v1270 = vunpack.c.l.b16 %v1174
      %v1271 = vunpack.c.l.b16 %v1175
      %v1272 = vunpack.c.l.b16 %v1176
      %v1273 = vunpack.c.l.b16 %v1177
      %v1274 = vunpack.c.l.b16 %v1178
      %v1275 = vunpack.c.l.b16 %v1179
      %v1276 = vunpack.c.l.b16 %v1180
      %v1277 = vunpack.c.l.b16 %v1181
      %v1278 = vunpack.c.l.b16 %v1182
      %v1279 = vunpack.c.l.b16 %v1183
      %v1280 = vunpack.c.l.b16 %v1184
      %v1281 = vunpack.c.l.b16 %v1185
      %v1282 = vunpack.c.l.b16 %v1186
      %v1283 = vunpack.c.l.b16 %v1187
      %v1284 = vunpack.c.l.b16 %v1188
      %v1285 = vunpack.c.l.b16 %v1189
      %v1286 = vunpack.c.l.b16 %v1190
      %v1287 = vunpack.c.l.b16 %v1191
      %v1288 = vunpack.c.l.b16 %v1192
      %v1289 = vunpack.c.l.b16 %v1193
      %v1290 = vunpack.c.l.b16 %v1194
      %v1291 = vunpack.c.l.b16 %v1195
      %v1292 = vunpack.c.l.b16 %v1196
      %v1293 = vunpack.c.l.b16 %v1197
      %v1294 = vunpack.c.l.b16 %v1198
      %v1295 = vunpack.c.l.b16 %v1199
      %v1296 = vunpack.c.l.b16 %v1200
      %v1297 = vunpack.c.l.b16 %v1201
      %v1298 = vunpack.c.l.b16 %v1202
      %v1299 = vunpack.c.l.b16 %v1203
      %v1300 = vunpack.c.l.b16 %v1204
      %v1301 = vunpack.c.l.b16 %v1205
      %v1302 = vunpack.c.l.b16 %v1206
      %v1303 = vunpack.c.l.b16 %v1207
      %v1304 = vunpack.c.l.b16 %v1208
      %v1305 = vunpack.c.l.b16 %v1209
      %v1306 = vunpack.c.l.b16 %v1210
      %v1307 = vunpack.c.l.b16 %v1211
      %v1308 = vunpack.c.l.b16 %v1212
      %v1309 = vunpack.c.l.b16 %v1213
      %v1310 = vunpack.c.l.b16 %v1214
      %v1311 = vunpack.c.l.b16 %v1215
      %v1312 = vunpack.c.l.b16 %v1216
      %v1313 = vpack.c.b16 %v1266, %v1265
      %v1314 = vpack.c.b16 %v1268, %v1267
      %v1315 = vpack.c.b16 %v1270, %v1269
      %v1316 = vpack.c.b16 %v1272, %v1271
      %v1317 = vpack.c.b16 %v1274, %v1273
      %v1318 = vpack.c.b16 %v1276, %v1275
      %v1319 = vpack.c.b16 %v1278, %v1277
      %v1320 = vpack.c.b16 %v1280, %v1279
      %v1321 = vpack.c.b16 %v1282, %v1281
      %v1322 = vpack.c.b16 %v1284, %v1283
      %v1323 = vpack.c.b16 %v1286, %v1285
      %v1324 = vpack.c.b16 %v1288, %v1287
      %v1325 = vpack.c.b16 %v1290, %v1289
      %v1326 = vpack.c.b16 %v1292, %v1291
      %v1327 = vpack.c.b16 %v1294, %v1293
      %v1328 = vpack.c.b16 %v1296, %v1295
      %v1329 = vpack.c.b16 %v1298, %v1297
      %v1330 = vpack.c.b16 %v1300, %v1299
      %v1331 = vpack.c.b16 %v1302, %v1301
      %v1332 = vpack.c.b16 %v1304, %v1303
      %v1333 = vpack.c.b16 %v1306, %v1305
      %v1334 = vpack.c.b16 %v1308, %v1307
      %v1335 = vpack.c.b16 %v1310, %v1309
      %v1336 = vpack.c.b16 %v1312, %v1311
      %1361 = vmatprep.subr.bf16.mxu0 0
      %1362 = vmatpush1.bf16.msra.mxu0 %v1313
      %1363 = vmatprep.subr.bf16.mxu0 0
      %1364 = vmatpush1.bf16.msra.mxu0 %v1314
      %1365 = vmatprep.subr.bf16.mxu0 0
      %1366 = vmatpush1.bf16.msra.mxu0 %v1315
      %1367 = vmatprep.subr.bf16.mxu0 0
      %1368 = vmatpush1.bf16.msra.mxu0 %v1316
      %1369 = vmatprep.subr.bf16.mxu0 0
      %1370 = vmatpush1.bf16.msra.mxu0 %v1317
      %1371 = vmatprep.subr.bf16.mxu0 0
      %1372 = vmatpush1.bf16.msra.mxu0 %v1318
      %1373 = vmatprep.subr.bf16.mxu0 0
      %1374 = vmatpush1.bf16.msra.mxu0 %v1319
      %1375 = vmatprep.subr.bf16.mxu0 0
      %1376 = vmatpush1.bf16.msra.mxu0 %v1320
      %1377 = vmatprep.subr.bf16.mxu0 0
      %1378 = vmatpush1.bf16.msra.mxu0 %v1321
      %1379 = vmatprep.subr.bf16.mxu0 0
      %1380 = vmatpush1.bf16.msra.mxu0 %v1322
      %1381 = vmatprep.subr.bf16.mxu0 0
      %1382 = vmatpush1.bf16.msra.mxu0 %v1323
      %1383 = vmatprep.subr.bf16.mxu0 0
      %1384 = vmatpush1.bf16.msra.mxu0 %v1324
      %1385 = vmatprep.subr.bf16.mxu0 0
      %1386 = vmatpush1.bf16.msra.mxu0 %v1325
      %1387 = vmatprep.subr.bf16.mxu0 0
      %1388 = vmatpush1.bf16.msra.mxu0 %v1326
      %1389 = vmatprep.subr.bf16.mxu0 0
      %1390 = vmatpush1.bf16.msra.mxu0 %v1327
      %1391 = vmatprep.subr.bf16.mxu0 0
      %1392 = vmatpush1.bf16.msra.mxu0 %v1328
      %1393 = vmatprep.mubr.bf16.mxu0 %v376
      %1394 = vmatmul.mubr.bf16.gmra.mrb[0].mxu0 %v523
      %v1395 = vpop.f32.mrb[0].mxu0
      %v1396 = vadd.f32 0.0, %v1395
      %v1397 = vpop.f32.mrb[0].mxu0
      %v1398 = vpop.f32.mrb[0].mxu0
      %v1399 = vadd.f32 0.0, %v1398
      %v1400 = vpop.f32.mrb[0].mxu0
      %1401 = vmatprep.mubr.bf16.mxu0 %v377
      %1402 = vmatmul.mubr.bf16.gmra.mrb[0].mxu0 %v524
      %v1403 = vpop.f32.mrb[0].mxu0
      %v1404 = vadd.f32 0.0, %v1403
      %v1405 = vpop.f32.mrb[0].mxu0
      %v1406 = vpop.f32.mrb[0].mxu0
      %v1407 = vadd.f32 0.0, %v1406
      %v1408 = vpop.f32.mrb[0].mxu0
      %1409 = vmatprep.mubr.bf16.mxu0 %v378
      %1410 = vmatmul.mubr.bf16.gmra.mrb[0].mxu0 %v525
      %v1411 = vpop.f32.mrb[0].mxu0
      %v1412 = vadd.f32 0.0, %v1411
      %v1413 = vpop.f32.mrb[0].mxu0
      %v1414 = vpop.f32.mrb[0].mxu0
      %v1415 = vadd.f32 0.0, %v1414
      %v1416 = vpop.f32.mrb[0].mxu0
      %1417 = vmatprep.mubr.bf16.mxu0 %v379
      %1418 = vmatmul.mubr.bf16.gmra.mrb[0].mxu0 %v526
      %v1419 = vpop.f32.mrb[0].mxu0
      %v1420 = vadd.f32 0.0, %v1419
      %v1421 = vpop.f32.mrb[0].mxu0
      %v1422 = vpop.f32.mrb[0].mxu0
      %v1423 = vadd.f32 0.0, %v1422
      %v1424 = vpop.f32.mrb[0].mxu0
      %1425 = vmatprep.mubr.bf16.mxu0 %v380
      %1426 = vmatmul.mubr.bf16.gmra.mrb[0].mxu0 %v527
      %v1427 = vpop.f32.mrb[0].mxu0
      %v1428 = vadd.f32 0.0, %v1427
      %v1429 = vpop.f32.mrb[0].mxu0
      %v1430 = vpop.f32.mrb[0].mxu0
      %v1431 = vadd.f32 0.0, %v1430
      %v1432 = vpop.f32.mrb[0].mxu0
      %1433 = vmatprep.mubr.bf16.mxu0 %v381
      %1434 = vmatmul.mubr.bf16.gmra.mrb[0].mxu0 %v528
      %v1435 = vpop.f32.mrb[0].mxu0
      %v1436 = vadd.f32 0.0, %v1435
      %v1437 = vpop.f32.mrb[0].mxu0
      %v1438 = vpop.f32.mrb[0].mxu0
      %v1439 = vadd.f32 0.0, %v1438
      %v1440 = vpop.f32.mrb[0].mxu0
      %1441 = vmatprep.mubr.bf16.mxu0 %v382
      %1442 = vmatmul.mubr.bf16.gmra.mrb[0].mxu0 %v529
      %v1443 = vpop.f32.mrb[0].mxu0
      %v1444 = vadd.f32 0.0, %v1443
      %v1445 = vpop.f32.mrb[0].mxu0
      %v1446 = vpop.f32.mrb[0].mxu0
      %v1447 = vadd.f32 0.0, %v1446
      %v1448 = vpop.f32.mrb[0].mxu0
      %1449 = vmatprep.mubr.bf16.mxu0 %v383
      %1450 = vmatmul.mubr.bf16.gmra.mrb[0].mxu0 %v530
      %v1451 = vpop.f32.mrb[0].mxu0
      %v1452 = vadd.f32 0.0, %v1451
      %v1453 = vpop.f32.mrb[0].mxu0
      %v1454 = vpop.f32.mrb[0].mxu0
      %v1455 = vadd.f32 0.0, %v1454
      %v1456 = vpop.f32.mrb[0].mxu0
      %1457 = vmatprep.mubr.bf16.mxu0 %v384
      %1458 = vmatmul.mubr.bf16.gmra.mrb[0].mxu0 %v531
      %v1459 = vpop.f32.mrb[0].mxu0
      %v1460 = vadd.f32 0.0, %v1459
      %v1461 = vpop.f32.mrb[0].mxu0
      %v1462 = vpop.f32.mrb[0].mxu0
      %v1463 = vadd.f32 0.0, %v1462
      %v1464 = vpop.f32.mrb[0].mxu0
      %1465 = vmatprep.mubr.bf16.mxu0 %v385
      %1466 = vmatmul.mubr.bf16.gmra.mrb[0].mxu0 %v532
      %v1467 = vpop.f32.mrb[0].mxu0
      %v1468 = vadd.f32 0.0, %v1467
      %v1469 = vpop.f32.mrb[0].mxu0
      %v1470 = vpop.f32.mrb[0].mxu0
      %v1471 = vadd.f32 0.0, %v1470
      %v1472 = vpop.f32.mrb[0].mxu0
      %1473 = vmatprep.mubr.bf16.mxu0 %v386
      %1474 = vmatmul.mubr.bf16.gmra.mrb[0].mxu0 %v533
      %v1475 = vpop.f32.mrb[0].mxu0
      %v1476 = vadd.f32 0.0, %v1475
      %v1477 = vpop.f32.mrb[0].mxu0
      %v1478 = vpop.f32.mrb[0].mxu0
      %v1479 = vadd.f32 0.0, %v1478
      %v1480 = vpop.f32.mrb[0].mxu0
      %1481 = vmatprep.mubr.bf16.mxu0 %v387
      %1482 = vmatmul.mubr.bf16.gmra.mrb[0].mxu0 %v534
      %v1483 = vpop.f32.mrb[0].mxu0
      %v1484 = vadd.f32 0.0, %v1483
      %v1485 = vpop.f32.mrb[0].mxu0
      %v1486 = vpop.f32.mrb[0].mxu0
      %v1487 = vadd.f32 0.0, %v1486
      %v1488 = vpop.f32.mrb[0].mxu0
      %1489 = vmatprep.mubr.bf16.mxu0 %v388
      %1490 = vmatmul.mubr.bf16.gmra.mrb[0].mxu0 %v535
      %v1491 = vpop.f32.mrb[0].mxu0
      %v1492 = vadd.f32 0.0, %v1491
      %v1493 = vpop.f32.mrb[0].mxu0
      %v1494 = vpop.f32.mrb[0].mxu0
      %v1495 = vadd.f32 0.0, %v1494
      %v1496 = vpop.f32.mrb[0].mxu0
      %1497 = vmatprep.mubr.bf16.mxu0 %v389
      %1498 = vmatmul.mubr.bf16.gmra.mrb[0].mxu0 %v536
      %v1499 = vpop.f32.mrb[0].mxu0
      %v1500 = vadd.f32 0.0, %v1499
      %v1501 = vpop.f32.mrb[0].mxu0
      %v1502 = vpop.f32.mrb[0].mxu0
      %v1503 = vadd.f32 0.0, %v1502
      %v1504 = vpop.f32.mrb[0].mxu0
      %1505 = vmatprep.mubr.bf16.mxu0 %v390
      %1506 = vmatmul.mubr.bf16.gmra.mrb[0].mxu0 %v537
      %v1507 = vpop.f32.mrb[0].mxu0
      %v1508 = vadd.f32 0.0, %v1507
      %v1509 = vpop.f32.mrb[0].mxu0
      %v1510 = vpop.f32.mrb[0].mxu0
      %v1511 = vadd.f32 0.0, %v1510
      %v1512 = vpop.f32.mrb[0].mxu0
      %1513 = vmatprep.mubr.bf16.mxu0 %v391
      %1514 = vmatmul.mubr.bf16.gmra.mrb[0].mxu0 %v538
      %v1515 = vpop.f32.mrb[0].mxu0
      %v1516 = vadd.f32 0.0, %v1515
      %v1517 = vpop.f32.mrb[0].mxu0
      %v1518 = vpop.f32.mrb[0].mxu0
      %v1519 = vadd.f32 0.0, %v1518
      %v1520 = vpop.f32.mrb[0].mxu0
      %1521 = vdwg.mxu0
      %1522 = vmatprep.subr.bf16.mxu0 0
      %1523 = vmatpush1.bf16.msra.mxu0 %v1329
      %1524 = vmatprep.subr.bf16.mxu0 0
      %1525 = vmatpush1.bf16.msra.mxu0 %v1330
      %1526 = vmatprep.subr.bf16.mxu0 0
      %1527 = vmatpush1.bf16.msra.mxu0 %v1331
      %1528 = vmatprep.subr.bf16.mxu0 0
      %1529 = vmatpush1.bf16.msra.mxu0 %v1332
      %1530 = vmatprep.subr.bf16.mxu0 0
      %1531 = vmatpush1.bf16.msra.mxu0 %v1333
      %1532 = vmatprep.subr.bf16.mxu0 0
      %1533 = vmatpush1.bf16.msra.mxu0 %v1334
      %1534 = vmatprep.subr.bf16.mxu0 0
      %1535 = vmatpush1.bf16.msra.mxu0 %v1335
      %1536 = vmatprep.subr.bf16.mxu0 0
      %1537 = vmatpush1.bf16.msra.mxu0 %v1336
      %1538 = vmatprep.subr.bf16.mxu0 0
      %1539 = vmatpush1.bf16.msra.mxu0 0
      %1540 = vmatprep.subr.bf16.mxu0 0
      %1541 = vmatpush1.bf16.msra.mxu0 0
      %1542 = vmatprep.subr.bf16.mxu0 0
      %1543 = vmatpush1.bf16.msra.mxu0 0
      %1544 = vmatprep.subr.bf16.mxu0 0
      %1545 = vmatpush1.bf16.msra.mxu0 0
      %1546 = vmatprep.subr.bf16.mxu0 0
      %1547 = vmatpush1.bf16.msra.mxu0 0
      %1548 = vmatprep.subr.bf16.mxu0 0
      %1549 = vmatpush1.bf16.msra.mxu0 0
      %1550 = vmatprep.subr.bf16.mxu0 0
      %1551 = vmatpush1.bf16.msra.mxu0 0
      %1552 = vmatprep.subr.bf16.mxu0 0
      %1553 = vmatpush1.bf16.msra.mxu0 0
      %1554 = vmatprep.mubr.bf16.mxu0 0
      %1555 = vmatmul.mubr.bf16.gmra.mrb[0].mxu0 %v590
      %v1556 = vpop.f32.mrb[0].mxu0
      %v1557 = vadd.f32 %v1396, %v1556
      %v1558 = vpop.f32.mrb[0].mxu0
      %v1559 = vpop.f32.mrb[0].mxu0
      %v1560 = vadd.f32 %v1399, %v1559
      %v1561 = vpop.f32.mrb[0].mxu0
      %1562 = vmatprep.mubr.bf16.mxu0 0
      %1563 = vmatmul.mubr.bf16.gmra.mrb[0].mxu0 %v591
      %v1564 = vpop.f32.mrb[0].mxu0
      %v1565 = vadd.f32 %v1404, %v1564
      %v1566 = vpop.f32.mrb[0].mxu0
      %v1567 = vpop.f32.mrb[0].mxu0
      %v1568 = vadd.f32 %v1407, %v1567
      %v1569 = vpop.f32.mrb[0].mxu0
      %1570 = vmatprep.mubr.bf16.mxu0 0
      %1571 = vmatmul.mubr.bf16.gmra.mrb[0].mxu0 %v592
      %v1572 = vpop.f32.mrb[0].mxu0
      %v1573 = vadd.f32 %v1412, %v1572
      %v1574 = vpop.f32.mrb[0].mxu0
      %v1575 = vpop.f32.mrb[0].mxu0
      %v1576 = vadd.f32 %v1415, %v1575
      %v1577 = vpop.f32.mrb[0].mxu0
      %1578 = vmatprep.mubr.bf16.mxu0 0
      %1579 = vmatmul.mubr.bf16.gmra.mrb[0].mxu0 %v593
      %v1580 = vpop.f32.mrb[0].mxu0
      %v1581 = vadd.f32 %v1420, %v1580
      %v1582 = vpop.f32.mrb[0].mxu0
      %v1583 = vpop.f32.mrb[0].mxu0
      %v1584 = vadd.f32 %v1423, %v1583
      %v1585 = vpop.f32.mrb[0].mxu0
      %1586 = vmatprep.mubr.bf16.mxu0 0
      %1587 = vmatmul.mubr.bf16.gmra.mrb[0].mxu0 %v594
      %v1588 = vpop.f32.mrb[0].mxu0
      %v1589 = vadd.f32 %v1428, %v1588
      %v1590 = vpop.f32.mrb[0].mxu0
      %v1591 = vpop.f32.mrb[0].mxu0
      %v1592 = vadd.f32 %v1431, %v1591
      %v1593 = vpop.f32.mrb[0].mxu0
      %1594 = vmatprep.mubr.bf16.mxu0 0
      %1595 = vmatmul.mubr.bf16.gmra.mrb[0].mxu0 %v595
      %v1596 = vpop.f32.mrb[0].mxu0
      %v1597 = vadd.f32 %v1436, %v1596
      %v1598 = vpop.f32.mrb[0].mxu0
      %v1599 = vpop.f32.mrb[0].mxu0
      %v1600 = vadd.f32 %v1439, %v1599
      %v1601 = vpop.f32.mrb[0].mxu0
      %1602 = vmatprep.mubr.bf16.mxu0 0
      %1603 = vmatmul.mubr.bf16.gmra.mrb[0].mxu0 %v596
      %v1604 = vpop.f32.mrb[0].mxu0
      %v1605 = vadd.f32 %v1444, %v1604
      %v1606 = vpop.f32.mrb[0].mxu0
      %v1607 = vpop.f32.mrb[0].mxu0
      %v1608 = vadd.f32 %v1447, %v1607
      %v1609 = vpop.f32.mrb[0].mxu0
      %1610 = vmatprep.mubr.bf16.mxu0 0
      %1611 = vmatmul.mubr.bf16.gmra.mrb[0].mxu0 %v597
      %v1612 = vpop.f32.mrb[0].mxu0
      %v1613 = vadd.f32 %v1452, %v1612
      %v1614 = vpop.f32.mrb[0].mxu0
      %v1615 = vpop.f32.mrb[0].mxu0
      %v1616 = vadd.f32 %v1455, %v1615
      %v1617 = vpop.f32.mrb[0].mxu0
      %1618 = vmatprep.mubr.bf16.mxu0 0
      %1619 = vmatmul.mubr.bf16.gmra.mrb[0].mxu0 %v598
      %v1620 = vpop.f32.mrb[0].mxu0
      %v1621 = vadd.f32 %v1460, %v1620
      %v1622 = vpop.f32.mrb[0].mxu0
      %v1623 = vpop.f32.mrb[0].mxu0
      %v1624 = vadd.f32 %v1463, %v1623
      %v1625 = vpop.f32.mrb[0].mxu0
      %1626 = vmatprep.mubr.bf16.mxu0 0
      %1627 = vmatmul.mubr.bf16.gmra.mrb[0].mxu0 %v599
      %v1628 = vpop.f32.mrb[0].mxu0
      %v1629 = vadd.f32 %v1468, %v1628
      %v1630 = vpop.f32.mrb[0].mxu0
      %v1631 = vpop.f32.mrb[0].mxu0
      %v1632 = vadd.f32 %v1471, %v1631
      %v1633 = vpop.f32.mrb[0].mxu0
      %1634 = vmatprep.mubr.bf16.mxu0 0
      %1635 = vmatmul.mubr.bf16.gmra.mrb[0].mxu0 %v600
      %v1636 = vpop.f32.mrb[0].mxu0
      %v1637 = vadd.f32 %v1476, %v1636
      %v1638 = vpop.f32.mrb[0].mxu0
      %v1639 = vpop.f32.mrb[0].mxu0
      %v1640 = vadd.f32 %v1479, %v1639
      %v1641 = vpop.f32.mrb[0].mxu0
      %1642 = vmatprep.mubr.bf16.mxu0 0
      %1643 = vmatmul.mubr.bf16.gmra.mrb[0].mxu0 %v601
      %v1644 = vpop.f32.mrb[0].mxu0
      %v1645 = vadd.f32 %v1484, %v1644
      %v1646 = vpop.f32.mrb[0].mxu0
      %v1647 = vpop.f32.mrb[0].mxu0
      %v1648 = vadd.f32 %v1487, %v1647
      %v1649 = vpop.f32.mrb[0].mxu0
      %1650 = vmatprep.mubr.bf16.mxu0 0
      %1651 = vmatmul.mubr.bf16.gmra.mrb[0].mxu0 %v602
      %v1652 = vpop.f32.mrb[0].mxu0
      %v1653 = vadd.f32 %v1492, %v1652
      %v1654 = vpop.f32.mrb[0].mxu0
      %v1655 = vpop.f32.mrb[0].mxu0
      %v1656 = vadd.f32 %v1495, %v1655
      %v1657 = vpop.f32.mrb[0].mxu0
      %1658 = vmatprep.mubr.bf16.mxu0 0
      %1659 = vmatmul.mubr.bf16.gmra.mrb[0].mxu0 %v603
      %v1660 = vpop.f32.mrb[0].mxu0
      %v1661 = vadd.f32 %v1500, %v1660
      %v1662 = vpop.f32.mrb[0].mxu0
      %v1663 = vpop.f32.mrb[0].mxu0
      %v1664 = vadd.f32 %v1503, %v1663
      %v1665 = vpop.f32.mrb[0].mxu0
      %1666 = vmatprep.mubr.bf16.mxu0 0
      %1667 = vmatmul.mubr.bf16.gmra.mrb[0].mxu0 %v604
      %v1668 = vpop.f32.mrb[0].mxu0
      %v1669 = vadd.f32 %v1508, %v1668
      %v1670 = vpop.f32.mrb[0].mxu0
      %v1671 = vpop.f32.mrb[0].mxu0
      %v1672 = vadd.f32 %v1511, %v1671
      %v1673 = vpop.f32.mrb[0].mxu0
      %1674 = vmatprep.mubr.bf16.mxu0 0
      %1675 = vmatmul.mubr.bf16.gmra.mrb[0].mxu0 %v605
      %v1676 = vpop.f32.mrb[0].mxu0
      %v1677 = vadd.f32 %v1516, %v1676
      %v1678 = vpop.f32.mrb[0].mxu0
      %v1679 = vpop.f32.mrb[0].mxu0
      %v1680 = vadd.f32 %v1519, %v1679
      %v1681 = vpop.f32.mrb[0].mxu0
      %1682 = vdwg.mxu0
      %v1683 = vld [vmem:[#allocation2] sm:$0xff]
      %v1684 = vld [vmem:[#allocation2 + $0x8] sm:$0xff]
      %v1685 = vld [vmem:[#allocation2 + $0x10] sm:$0xff]
      %v1686 = vld [vmem:[#allocation2 + $0x18] sm:$0xff]
      %v1687 = vld [vmem:[#allocation2 + $0x20] sm:$0xff]
      %v1688 = vld [vmem:[#allocation2 + $0x28] sm:$0xff]
      %v1689 = vld [vmem:[#allocation2 + $0x30] sm:$0xff]
      %v1690 = vld [vmem:[#allocation2 + $0x38] sm:$0xff]
      %v1691 = vld [vmem:[#allocation2 + $0x40] sm:$0xff]
      %v1692 = vld [vmem:[#allocation2 + $0x48] sm:$0xff]
      %v1693 = vld [vmem:[#allocation2 + $0x50] sm:$0xff]
      %v1694 = vld [vmem:[#allocation2 + $0x58] sm:$0xff]
      %v1695 = vld [vmem:[#allocation2 + $0x60] sm:$0xff]
      %v1696 = vld [vmem:[#allocation2 + $0x68] sm:$0xff]
      %v1697 = vld [vmem:[#allocation2 + $0x70] sm:$0xff]
      %v1698 = vld [vmem:[#allocation2 + $0x78] sm:$0xff]
      %v1699 = vld [vmem:[#allocation2 + $0x80] sm:$0xff]
      %v1700 = vld [vmem:[#allocation2 + $0x88] sm:$0xff]
      %v1701 = vld [vmem:[#allocation2 + $0x90] sm:$0xff]
      %v1702 = vld [vmem:[#allocation2 + $0x98] sm:$0xff]
      %v1703 = vld [vmem:[#allocation2 + $0xa0] sm:$0xff]
      %v1704 = vld [vmem:[#allocation2 + $0xa8] sm:$0xff]
      %v1705 = vld [vmem:[#allocation2 + $0xb0] sm:$0xff]
      %v1706 = vld [vmem:[#allocation2 + $0xb8] sm:$0xff]
      %v1707 = vld [vmem:[#allocation2 + $0xc0] sm:$0xff]
      %v1708 = vld [vmem:[#allocation2 + $0xc8] sm:$0xff]
      %v1709 = vld [vmem:[#allocation2 + $0xd0] sm:$0xff]
      %v1710 = vld [vmem:[#allocation2 + $0xd8] sm:$0xff]
      %v1711 = vld [vmem:[#allocation2 + $0xe0] sm:$0xff]
      %v1712 = vld [vmem:[#allocation2 + $0xe8] sm:$0xff]
      %v1713 = vld [vmem:[#allocation2 + $0xf0] sm:$0xff]
      %v1714 = vld [vmem:[#allocation2 + $0xf8] sm:$0xff]
      %v1715 = vadd.f32 %v1683, %v1557
      %v1716 = vadd.f32 %v1684, %v1560
      %v1717 = vadd.f32 %v1685, %v1565
      %v1718 = vadd.f32 %v1686, %v1568
      %v1719 = vadd.f32 %v1687, %v1573
      %v1720 = vadd.f32 %v1688, %v1576
      %v1721 = vadd.f32 %v1689, %v1581
      %v1722 = vadd.f32 %v1690, %v1584
      %v1723 = vadd.f32 %v1691, %v1589
      %v1724 = vadd.f32 %v1692, %v1592
      %v1725 = vadd.f32 %v1693, %v1597
      %v1726 = vadd.f32 %v1694, %v1600
      %v1727 = vadd.f32 %v1695, %v1605
      %v1728 = vadd.f32 %v1696, %v1608
      %v1729 = vadd.f32 %v1697, %v1613
      %v1730 = vadd.f32 %v1698, %v1616
      %v1731 = vadd.f32 %v1699, %v1621
      %v1732 = vadd.f32 %v1700, %v1624
      %v1733 = vadd.f32 %v1701, %v1629
      %v1734 = vadd.f32 %v1702, %v1632
      %v1735 = vadd.f32 %v1703, %v1637
      %v1736 = vadd.f32 %v1704, %v1640
      %v1737 = vadd.f32 %v1705, %v1645
      %v1738 = vadd.f32 %v1706, %v1648
      %v1739 = vadd.f32 %v1707, %v1653
      %v1740 = vadd.f32 %v1708, %v1656
      %v1741 = vadd.f32 %v1709, %v1661
      %v1742 = vadd.f32 %v1710, %v1664
      %v1743 = vadd.f32 %v1711, %v1669
      %v1744 = vadd.f32 %v1712, %v1672
      %v1745 = vadd.f32 %v1713, %v1677
      %v1746 = vadd.f32 %v1714, %v1680
      %1747 = vst [vmem:[#allocation2] sm:$0xff] %v1715
      %1748 = vst [vmem:[#allocation2 + $0x8] sm:$0xff] %v1716
      %1749 = vst [vmem:[#allocation2 + $0x10] sm:$0xff] %v1717
      %1750 = vst [vmem:[#allocation2 + $0x18] sm:$0xff] %v1718
      %1751 = vst [vmem:[#allocation2 + $0x20] sm:$0xff] %v1719
      %1752 = vst [vmem:[#allocation2 + $0x28] sm:$0xff] %v1720
      %1753 = vst [vmem:[#allocation2 + $0x30] sm:$0xff] %v1721
      %1754 = vst [vmem:[#allocation2 + $0x38] sm:$0xff] %v1722
      %1755 = vst [vmem:[#allocation2 + $0x40] sm:$0xff] %v1723
      %1756 = vst [vmem:[#allocation2 + $0x48] sm:$0xff] %v1724
      %1757 = vst [vmem:[#allocation2 + $0x50] sm:$0xff] %v1725
      %1758 = vst [vmem:[#allocation2 + $0x58] sm:$0xff] %v1726
      %1759 = vst [vmem:[#allocation2 + $0x60] sm:$0xff] %v1727
      %1760 = vst [vmem:[#allocation2 + $0x68] sm:$0xff] %v1728
      %1761 = vst [vmem:[#allocation2 + $0x70] sm:$0xff] %v1729
      %1762 = vst [vmem:[#allocation2 + $0x78] sm:$0xff] %v1730
      %1763 = vst [vmem:[#allocation2 + $0x80] sm:$0xff] %v1731
      %1764 = vst [vmem:[#allocation2 + $0x88] sm:$0xff] %v1732
      %1765 = vst [vmem:[#allocation2 + $0x90] sm:$0xff] %v1733
      %1766 = vst [vmem:[#allocation2 + $0x98] sm:$0xff] %v1734
      %1767 = vst [vmem:[#allocation2 + $0xa0] sm:$0xff] %v1735
      %1768 = vst [vmem:[#allocation2 + $0xa8] sm:$0xff] %v1736
      %1769 = vst [vmem:[#allocation2 + $0xb0] sm:$0xff] %v1737
      %1770 = vst [vmem:[#allocation2 + $0xb8] sm:$0xff] %v1738
      %1771 = vst [vmem:[#allocation2 + $0xc0] sm:$0xff] %v1739
      %1772 = vst [vmem:[#allocation2 + $0xc8] sm:$0xff] %v1740
      %1773 = vst [vmem:[#allocation2 + $0xd0] sm:$0xff] %v1741
      %1774 = vst [vmem:[#allocation2 + $0xd8] sm:$0xff] %v1742
      %1775 = vst [vmem:[#allocation2 + $0xe0] sm:$0xff] %v1743
      %1776 = vst [vmem:[#allocation2 + $0xe8] sm:$0xff] %v1744
      %1777 = vst [vmem:[#allocation2 + $0xf0] sm:$0xff] %v1745
      %1778 = vst [vmem:[#allocation2 + $0xf8] sm:$0xff] %v1746
      %s1779 = scalar_lea.vmem %s1, 384
      %v1780 = vld [vmem:[%s1779] sm:$0xf]
      %v1781 = vld [vmem:[%s1779 + $0x4] sm:$0xf]
      %v1782 = vld [vmem:[%s1779 + $0x8] sm:$0xf]
      %v1783 = vld [vmem:[%s1779 + $0xc] sm:$0xf]
      %v1784 = vld [vmem:[%s1779 + $0x10] sm:$0xf]
      %v1785 = vld [vmem:[%s1779 + $0x14] sm:$0xf]
      %v1786 = vld [vmem:[%s1779 + $0x18] sm:$0xf]
      %v1787 = vld [vmem:[%s1779 + $0x1c] sm:$0xf]
      %v1788 = vld [vmem:[%s1779 + $0x20] sm:$0xf]
      %v1789 = vld [vmem:[%s1779 + $0x24] sm:$0xf]
      %v1790 = vld [vmem:[%s1779 + $0x28] sm:$0xf]
      %v1791 = vld [vmem:[%s1779 + $0x2c] sm:$0xf]
      %v1792 = vld [vmem:[%s1779 + $0x30] sm:$0xf]
      %v1793 = vld [vmem:[%s1779 + $0x34] sm:$0xf]
      %v1794 = vld [vmem:[%s1779 + $0x38] sm:$0xf]
      %v1795 = vld [vmem:[%s1779 + $0x3c] sm:$0xf]
      %v1796 = vld [vmem:[%s1779 + $0x40] sm:$0xf]
      %v1797 = vld [vmem:[%s1779 + $0x44] sm:$0xf]
      %v1798 = vld [vmem:[%s1779 + $0x48] sm:$0xf]
      %v1799 = vld [vmem:[%s1779 + $0x4c] sm:$0xf]
      %v1800 = vld [vmem:[%s1779 + $0x50] sm:$0xf]
      %v1801 = vld [vmem:[%s1779 + $0x54] sm:$0xf]
      %v1802 = vld [vmem:[%s1779 + $0x58] sm:$0xf]
      %v1803 = vld [vmem:[%s1779 + $0x5c] sm:$0xf]
      %v1804 = vld [vmem:[%s1779 + $0x60] sm:$0xf]
      %v1805 = vld [vmem:[%s1779 + $0x64] sm:$0xf]
      %v1806 = vld [vmem:[%s1779 + $0x68] sm:$0xf]
      %v1807 = vld [vmem:[%s1779 + $0x6c] sm:$0xf]
      %v1808 = vld [vmem:[%s1779 + $0x70] sm:$0xf]
      %v1809 = vld [vmem:[%s1779 + $0x74] sm:$0xf]
      %v1810 = vld [vmem:[%s1779 + $0x78] sm:$0xf]
      %v1811 = vld [vmem:[%s1779 + $0x7c] sm:$0xf]
      %v1812 = vld [vmem:[%s1779 + $0x80] sm:$0xf]
      %v1813 = vld [vmem:[%s1779 + $0x84] sm:$0xf]
      %v1814 = vld [vmem:[%s1779 + $0x88] sm:$0xf]
      %v1815 = vld [vmem:[%s1779 + $0x8c] sm:$0xf]
      %v1816 = vld [vmem:[%s1779 + $0x90] sm:$0xf]
      %v1817 = vld [vmem:[%s1779 + $0x94] sm:$0xf]
      %v1818 = vld [vmem:[%s1779 + $0x98] sm:$0xf]
      %v1819 = vld [vmem:[%s1779 + $0x9c] sm:$0xf]
      %v1820 = vld [vmem:[%s1779 + $0xa0] sm:$0xf]
      %v1821 = vld [vmem:[%s1779 + $0xa4] sm:$0xf]
      %v1822 = vld [vmem:[%s1779 + $0xa8] sm:$0xf]
      %v1823 = vld [vmem:[%s1779 + $0xac] sm:$0xf]
      %v1824 = vld [vmem:[%s1779 + $0xb0] sm:$0xf]
      %v1825 = vld [vmem:[%s1779 + $0xb4] sm:$0xf]
      %v1826 = vld [vmem:[%s1779 + $0xb8] sm:$0xf]
      %v1827 = vld [vmem:[%s1779 + $0xbc] sm:$0xf]
      %v1876 = vunpack.c.l.b16 %v1780
      %v1877 = vunpack.c.l.b16 %v1781
      %v1878 = vunpack.c.l.b16 %v1782
      %v1879 = vunpack.c.l.b16 %v1783
      %v1880 = vunpack.c.l.b16 %v1784
      %v1881 = vunpack.c.l.b16 %v1785
      %v1882 = vunpack.c.l.b16 %v1786
      %v1883 = vunpack.c.l.b16 %v1787
      %v1884 = vunpack.c.l.b16 %v1788
      %v1885 = vunpack.c.l.b16 %v1789
      %v1886 = vunpack.c.l.b16 %v1790
      %v1887 = vunpack.c.l.b16 %v1791
      %v1888 = vunpack.c.l.b16 %v1792
      %v1889 = vunpack.c.l.b16 %v1793
      %v1890 = vunpack.c.l.b16 %v1794
      %v1891 = vunpack.c.l.b16 %v1795
      %v1892 = vunpack.c.l.b16 %v1796
      %v1893 = vunpack.c.l.b16 %v1797
      %v1894 = vunpack.c.l.b16 %v1798
      %v1895 = vunpack.c.l.b16 %v1799
      %v1896 = vunpack.c.l.b16 %v1800
      %v1897 = vunpack.c.l.b16 %v1801
      %v1898 = vunpack.c.l.b16 %v1802
      %v1899 = vunpack.c.l.b16 %v1803
      %v1900 = vunpack.c.l.b16 %v1804
      %v1901 = vunpack.c.l.b16 %v1805
      %v1902 = vunpack.c.l.b16 %v1806
      %v1903 = vunpack.c.l.b16 %v1807
      %v1904 = vunpack.c.l.b16 %v1808
      %v1905 = vunpack.c.l.b16 %v1809
      %v1906 = vunpack.c.l.b16 %v1810
      %v1907 = vunpack.c.l.b16 %v1811
      %v1908 = vunpack.c.l.b16 %v1812
      %v1909 = vunpack.c.l.b16 %v1813
      %v1910 = vunpack.c.l.b16 %v1814
      %v1911 = vunpack.c.l.b16 %v1815
      %v1912 = vunpack.c.l.b16 %v1816
      %v1913 = vunpack.c.l.b16 %v1817
      %v1914 = vunpack.c.l.b16 %v1818
      %v1915 = vunpack.c.l.b16 %v1819
      %v1916 = vunpack.c.l.b16 %v1820
      %v1917 = vunpack.c.l.b16 %v1821
      %v1918 = vunpack.c.l.b16 %v1822
      %v1919 = vunpack.c.l.b16 %v1823
      %v1920 = vunpack.c.l.b16 %v1824
      %v1921 = vunpack.c.l.b16 %v1825
      %v1922 = vunpack.c.l.b16 %v1826
      %v1923 = vunpack.c.l.b16 %v1827
      %v1924 = vpack.c.b16 %v1877, %v1876
      %v1925 = vpack.c.b16 %v1879, %v1878
      %v1926 = vpack.c.b16 %v1881, %v1880
      %v1927 = vpack.c.b16 %v1883, %v1882
      %v1928 = vpack.c.b16 %v1885, %v1884
      %v1929 = vpack.c.b16 %v1887, %v1886
      %v1930 = vpack.c.b16 %v1889, %v1888
      %v1931 = vpack.c.b16 %v1891, %v1890
      %v1932 = vpack.c.b16 %v1893, %v1892
      %v1933 = vpack.c.b16 %v1895, %v1894
      %v1934 = vpack.c.b16 %v1897, %v1896
      %v1935 = vpack.c.b16 %v1899, %v1898
      %v1936 = vpack.c.b16 %v1901, %v1900
      %v1937 = vpack.c.b16 %v1903, %v1902
      %v1938 = vpack.c.b16 %v1905, %v1904
      %v1939 = vpack.c.b16 %v1907, %v1906
      %v1940 = vpack.c.b16 %v1909, %v1908
      %v1941 = vpack.c.b16 %v1911, %v1910
      %v1942 = vpack.c.b16 %v1913, %v1912
      %v1943 = vpack.c.b16 %v1915, %v1914
      %v1944 = vpack.c.b16 %v1917, %v1916
      %v1945 = vpack.c.b16 %v1919, %v1918
      %v1946 = vpack.c.b16 %v1921, %v1920
      %v1947 = vpack.c.b16 %v1923, %v1922
      %1972 = vmatprep.subr.bf16.mxu0 0
      %1973 = vmatpush1.bf16.msra.mxu0 %v1924
      %1974 = vmatprep.subr.bf16.mxu0 0
      %1975 = vmatpush1.bf16.msra.mxu0 %v1925
      %1976 = vmatprep.subr.bf16.mxu0 0
      %1977 = vmatpush1.bf16.msra.mxu0 %v1926
      %1978 = vmatprep.subr.bf16.mxu0 0
      %1979 = vmatpush1.bf16.msra.mxu0 %v1927
      %1980 = vmatprep.subr.bf16.mxu0 0
      %1981 = vmatpush1.bf16.msra.mxu0 %v1928
      %1982 = vmatprep.subr.bf16.mxu0 0
      %1983 = vmatpush1.bf16.msra.mxu0 %v1929
      %1984 = vmatprep.subr.bf16.mxu0 0
      %1985 = vmatpush1.bf16.msra.mxu0 %v1930
      %1986 = vmatprep.subr.bf16.mxu0 0
      %1987 = vmatpush1.bf16.msra.mxu0 %v1931
      %1988 = vmatprep.subr.bf16.mxu0 0
      %1989 = vmatpush1.bf16.msra.mxu0 %v1932
      %1990 = vmatprep.subr.bf16.mxu0 0
      %1991 = vmatpush1.bf16.msra.mxu0 %v1933
      %1992 = vmatprep.subr.bf16.mxu0 0
      %1993 = vmatpush1.bf16.msra.mxu0 %v1934
      %1994 = vmatprep.subr.bf16.mxu0 0
      %1995 = vmatpush1.bf16.msra.mxu0 %v1935
      %1996 = vmatprep.subr.bf16.mxu0 0
      %1997 = vmatpush1.bf16.msra.mxu0 %v1936
      %1998 = vmatprep.subr.bf16.mxu0 0
      %1999 = vmatpush1.bf16.msra.mxu0 %v1937
      %2000 = vmatprep.subr.bf16.mxu0 0
      %2001 = vmatpush1.bf16.msra.mxu0 %v1938
      %2002 = vmatprep.subr.bf16.mxu0 0
      %2003 = vmatpush1.bf16.msra.mxu0 %v1939
      %2004 = vmatprep.mubr.bf16.mxu0 %v377
      %2005 = vmatmul.mubr.bf16.gmra.mrb[0].mxu0 %v524
      %v2006 = vpop.f32.mrb[0].mxu0
      %v2007 = vadd.f32 0.0, %v2006
      %v2008 = vpop.f32.mrb[0].mxu0
      %v2009 = vpop.f32.mrb[0].mxu0
      %v2010 = vadd.f32 0.0, %v2009
      %v2011 = vpop.f32.mrb[0].mxu0
      %2012 = vmatprep.mubr.bf16.mxu0 %v378
      %2013 = vmatmul.mubr.bf16.gmra.mrb[0].mxu0 %v525
      %v2014 = vpop.f32.mrb[0].mxu0
      %v2015 = vadd.f32 0.0, %v2014
      %v2016 = vpop.f32.mrb[0].mxu0
      %v2017 = vpop.f32.mrb[0].mxu0
      %v2018 = vadd.f32 0.0, %v2017
      %v2019 = vpop.f32.mrb[0].mxu0
      %2020 = vmatprep.mubr.bf16.mxu0 %v379
      %2021 = vmatmul.mubr.bf16.gmra.mrb[0].mxu0 %v526
      %v2022 = vpop.f32.mrb[0].mxu0
      %v2023 = vadd.f32 0.0, %v2022
      %v2024 = vpop.f32.mrb[0].mxu0
      %v2025 = vpop.f32.mrb[0].mxu0
      %v2026 = vadd.f32 0.0, %v2025
      %v2027 = vpop.f32.mrb[0].mxu0
      %2028 = vmatprep.mubr.bf16.mxu0 %v380
      %2029 = vmatmul.mubr.bf16.gmra.mrb[0].mxu0 %v527
      %v2030 = vpop.f32.mrb[0].mxu0
      %v2031 = vadd.f32 0.0, %v2030
      %v2032 = vpop.f32.mrb[0].mxu0
      %v2033 = vpop.f32.mrb[0].mxu0
      %v2034 = vadd.f32 0.0, %v2033
      %v2035 = vpop.f32.mrb[0].mxu0
      %2036 = vmatprep.mubr.bf16.mxu0 %v381
      %2037 = vmatmul.mubr.bf16.gmra.mrb[0].mxu0 %v528
      %v2038 = vpop.f32.mrb[0].mxu0
      %v2039 = vadd.f32 0.0, %v2038
      %v2040 = vpop.f32.mrb[0].mxu0
      %v2041 = vpop.f32.mrb[0].mxu0
      %v2042 = vadd.f32 0.0, %v2041
      %v2043 = vpop.f32.mrb[0].mxu0
      %2044 = vmatprep.mubr.bf16.mxu0 %v382
      %2045 = vmatmul.mubr.bf16.gmra.mrb[0].mxu0 %v529
      %v2046 = vpop.f32.mrb[0].mxu0
      %v2047 = vadd.f32 0.0, %v2046
      %v2048 = vpop.f32.mrb[0].mxu0
      %v2049 = vpop.f32.mrb[0].mxu0
      %v2050 = vadd.f32 0.0, %v2049
      %v2051 = vpop.f32.mrb[0].mxu0
      %2052 = vmatprep.mubr.bf16.mxu0 %v383
      %2053 = vmatmul.mubr.bf16.gmra.mrb[0].mxu0 %v530
      %v2054 = vpop.f32.mrb[0].mxu0
      %v2055 = vadd.f32 0.0, %v2054
      %v2056 = vpop.f32.mrb[0].mxu0
      %v2057 = vpop.f32.mrb[0].mxu0
      %v2058 = vadd.f32 0.0, %v2057
      %v2059 = vpop.f32.mrb[0].mxu0
      %2060 = vmatprep.mubr.bf16.mxu0 %v384
      %2061 = vmatmul.mubr.bf16.gmra.mrb[0].mxu0 %v531
      %v2062 = vpop.f32.mrb[0].mxu0
      %v2063 = vadd.f32 0.0, %v2062
      %v2064 = vpop.f32.mrb[0].mxu0
      %v2065 = vpop.f32.mrb[0].mxu0
      %v2066 = vadd.f32 0.0, %v2065
      %v2067 = vpop.f32.mrb[0].mxu0
      %2068 = vmatprep.mubr.bf16.mxu0 %v385
      %2069 = vmatmul.mubr.bf16.gmra.mrb[0].mxu0 %v532
      %v2070 = vpop.f32.mrb[0].mxu0
      %v2071 = vadd.f32 0.0, %v2070
      %v2072 = vpop.f32.mrb[0].mxu0
      %v2073 = vpop.f32.mrb[0].mxu0
      %v2074 = vadd.f32 0.0, %v2073
      %v2075 = vpop.f32.mrb[0].mxu0
      %2076 = vmatprep.mubr.bf16.mxu0 %v386
      %2077 = vmatmul.mubr.bf16.gmra.mrb[0].mxu0 %v533
      %v2078 = vpop.f32.mrb[0].mxu0
      %v2079 = vadd.f32 0.0, %v2078
      %v2080 = vpop.f32.mrb[0].mxu0
      %v2081 = vpop.f32.mrb[0].mxu0
      %v2082 = vadd.f32 0.0, %v2081
      %v2083 = vpop.f32.mrb[0].mxu0
      %2084 = vmatprep.mubr.bf16.mxu0 %v387
      %2085 = vmatmul.mubr.bf16.gmra.mrb[0].mxu0 %v534
      %v2086 = vpop.f32.mrb[0].mxu0
      %v2087 = vadd.f32 0.0, %v2086
      %v2088 = vpop.f32.mrb[0].mxu0
      %v2089 = vpop.f32.mrb[0].mxu0
      %v2090 = vadd.f32 0.0, %v2089
      %v2091 = vpop.f32.mrb[0].mxu0
      %2092 = vmatprep.mubr.bf16.mxu0 %v388
      %2093 = vmatmul.mubr.bf16.gmra.mrb[0].mxu0 %v535
      %v2094 = vpop.f32.mrb[0].mxu0
      %v2095 = vadd.f32 0.0, %v2094
      %v2096 = vpop.f32.mrb[0].mxu0
      %v2097 = vpop.f32.mrb[0].mxu0
      %v2098 = vadd.f32 0.0, %v2097
      %v2099 = vpop.f32.mrb[0].mxu0
      %2100 = vmatprep.mubr.bf16.mxu0 %v389
      %2101 = vmatmul.mubr.bf16.gmra.mrb[0].mxu0 %v536
      %v2102 = vpop.f32.mrb[0].mxu0
      %v2103 = vadd.f32 0.0, %v2102
      %v2104 = vpop.f32.mrb[0].mxu0
      %v2105 = vpop.f32.mrb[0].mxu0
      %v2106 = vadd.f32 0.0, %v2105
      %v2107 = vpop.f32.mrb[0].mxu0
      %2108 = vmatprep.mubr.bf16.mxu0 %v390
      %2109 = vmatmul.mubr.bf16.gmra.mrb[0].mxu0 %v537
      %v2110 = vpop.f32.mrb[0].mxu0
      %v2111 = vadd.f32 0.0, %v2110
      %v2112 = vpop.f32.mrb[0].mxu0
      %v2113 = vpop.f32.mrb[0].mxu0
      %v2114 = vadd.f32 0.0, %v2113
      %v2115 = vpop.f32.mrb[0].mxu0
      %2116 = vmatprep.mubr.bf16.mxu0 %v391
      %2117 = vmatmul.mubr.bf16.gmra.mrb[0].mxu0 %v538
      %v2118 = vpop.f32.mrb[0].mxu0
      %v2119 = vadd.f32 0.0, %v2118
      %v2120 = vpop.f32.mrb[0].mxu0
      %v2121 = vpop.f32.mrb[0].mxu0
      %v2122 = vadd.f32 0.0, %v2121
      %v2123 = vpop.f32.mrb[0].mxu0
      %2124 = vmatprep.mubr.bf16.mxu0 0
      %2125 = vmatmul.mubr.bf16.gmra.mrb[0].mxu0 0
      %v2126 = vpop.f32.mrb[0].mxu0
      %v2127 = vadd.f32 0.0, %v2126
      %v2128 = vpop.f32.mrb[0].mxu0
      %v2129 = vpop.f32.mrb[0].mxu0
      %v2130 = vadd.f32 0.0, %v2129
      %v2131 = vpop.f32.mrb[0].mxu0
      %2132 = vdwg.mxu0
      %2133 = vmatprep.subr.bf16.mxu0 0
      %2134 = vmatpush1.bf16.msra.mxu0 %v1940
      %2135 = vmatprep.subr.bf16.mxu0 0
      %2136 = vmatpush1.bf16.msra.mxu0 %v1941
      %2137 = vmatprep.subr.bf16.mxu0 0
      %2138 = vmatpush1.bf16.msra.mxu0 %v1942
      %2139 = vmatprep.subr.bf16.mxu0 0
      %2140 = vmatpush1.bf16.msra.mxu0 %v1943
      %2141 = vmatprep.subr.bf16.mxu0 0
      %2142 = vmatpush1.bf16.msra.mxu0 %v1944
      %2143 = vmatprep.subr.bf16.mxu0 0
      %2144 = vmatpush1.bf16.msra.mxu0 %v1945
      %2145 = vmatprep.subr.bf16.mxu0 0
      %2146 = vmatpush1.bf16.msra.mxu0 %v1946
      %2147 = vmatprep.subr.bf16.mxu0 0
      %2148 = vmatpush1.bf16.msra.mxu0 %v1947
      %2149 = vmatprep.subr.bf16.mxu0 0
      %2150 = vmatpush1.bf16.msra.mxu0 0
      %2151 = vmatprep.subr.bf16.mxu0 0
      %2152 = vmatpush1.bf16.msra.mxu0 0
      %2153 = vmatprep.subr.bf16.mxu0 0
      %2154 = vmatpush1.bf16.msra.mxu0 0
      %2155 = vmatprep.subr.bf16.mxu0 0
      %2156 = vmatpush1.bf16.msra.mxu0 0
      %2157 = vmatprep.subr.bf16.mxu0 0
      %2158 = vmatpush1.bf16.msra.mxu0 0
      %2159 = vmatprep.subr.bf16.mxu0 0
      %2160 = vmatpush1.bf16.msra.mxu0 0
      %2161 = vmatprep.subr.bf16.mxu0 0
      %2162 = vmatpush1.bf16.msra.mxu0 0
      %2163 = vmatprep.subr.bf16.mxu0 0
      %2164 = vmatpush1.bf16.msra.mxu0 0
      %2165 = vmatprep.mubr.bf16.mxu0 0
      %2166 = vmatmul.mubr.bf16.gmra.mrb[0].mxu0 %v591
      %v2167 = vpop.f32.mrb[0].mxu0
      %v2168 = vadd.f32 %v2007, %v2167
      %v2169 = vpop.f32.mrb[0].mxu0
      %v2170 = vpop.f32.mrb[0].mxu0
      %v2171 = vadd.f32 %v2010, %v2170
      %v2172 = vpop.f32.mrb[0].mxu0
      %2173 = vmatprep.mubr.bf16.mxu0 0
      %2174 = vmatmul.mubr.bf16.gmra.mrb[0].mxu0 %v592
      %v2175 = vpop.f32.mrb[0].mxu0
      %v2176 = vadd.f32 %v2015, %v2175
      %v2177 = vpop.f32.mrb[0].mxu0
      %v2178 = vpop.f32.mrb[0].mxu0
      %v2179 = vadd.f32 %v2018, %v2178
      %v2180 = vpop.f32.mrb[0].mxu0
      %2181 = vmatprep.mubr.bf16.mxu0 0
      %2182 = vmatmul.mubr.bf16.gmra.mrb[0].mxu0 %v593
      %v2183 = vpop.f32.mrb[0].mxu0
      %v2184 = vadd.f32 %v2023, %v2183
      %v2185 = vpop.f32.mrb[0].mxu0
      %v2186 = vpop.f32.mrb[0].mxu0
      %v2187 = vadd.f32 %v2026, %v2186
      %v2188 = vpop.f32.mrb[0].mxu0
      %2189 = vmatprep.mubr.bf16.mxu0 0
      %2190 = vmatmul.mubr.bf16.gmra.mrb[0].mxu0 %v594
      %v2191 = vpop.f32.mrb[0].mxu0
      %v2192 = vadd.f32 %v2031, %v2191
      %v2193 = vpop.f32.mrb[0].mxu0
      %v2194 = vpop.f32.mrb[0].mxu0
      %v2195 = vadd.f32 %v2034, %v2194
      %v2196 = vpop.f32.mrb[0].mxu0
      %2197 = vmatprep.mubr.bf16.mxu0 0
      %2198 = vmatmul.mubr.bf16.gmra.mrb[0].mxu0 %v595
      %v2199 = vpop.f32.mrb[0].mxu0
      %v2200 = vadd.f32 %v2039, %v2199
      %v2201 = vpop.f32.mrb[0].mxu0
      %v2202 = vpop.f32.mrb[0].mxu0
      %v2203 = vadd.f32 %v2042, %v2202
      %v2204 = vpop.f32.mrb[0].mxu0
      %2205 = vmatprep.mubr.bf16.mxu0 0
      %2206 = vmatmul.mubr.bf16.gmra.mrb[0].mxu0 %v596
      %v2207 = vpop.f32.mrb[0].mxu0
      %v2208 = vadd.f32 %v2047, %v2207
      %v2209 = vpop.f32.mrb[0].mxu0
      %v2210 = vpop.f32.mrb[0].mxu0
      %v2211 = vadd.f32 %v2050, %v2210
      %v2212 = vpop.f32.mrb[0].mxu0
      %2213 = vmatprep.mubr.bf16.mxu0 0
      %2214 = vmatmul.mubr.bf16.gmra.mrb[0].mxu0 %v597
      %v2215 = vpop.f32.mrb[0].mxu0
      %v2216 = vadd.f32 %v2055, %v2215
      %v2217 = vpop.f32.mrb[0].mxu0
      %v2218 = vpop.f32.mrb[0].mxu0
      %v2219 = vadd.f32 %v2058, %v2218
      %v2220 = vpop.f32.mrb[0].mxu0
      %2221 = vmatprep.mubr.bf16.mxu0 0
      %2222 = vmatmul.mubr.bf16.gmra.mrb[0].mxu0 %v598
      %v2223 = vpop.f32.mrb[0].mxu0
      %v2224 = vadd.f32 %v2063, %v2223
      %v2225 = vpop.f32.mrb[0].mxu0
      %v2226 = vpop.f32.mrb[0].mxu0
      %v2227 = vadd.f32 %v2066, %v2226
      %v2228 = vpop.f32.mrb[0].mxu0
      %2229 = vmatprep.mubr.bf16.mxu0 0
      %2230 = vmatmul.mubr.bf16.gmra.mrb[0].mxu0 %v599
      %v2231 = vpop.f32.mrb[0].mxu0
      %v2232 = vadd.f32 %v2071, %v2231
      %v2233 = vpop.f32.mrb[0].mxu0
      %v2234 = vpop.f32.mrb[0].mxu0
      %v2235 = vadd.f32 %v2074, %v2234
      %v2236 = vpop.f32.mrb[0].mxu0
      %2237 = vmatprep.mubr.bf16.mxu0 0
      %2238 = vmatmul.mubr.bf16.gmra.mrb[0].mxu0 %v600
      %v2239 = vpop.f32.mrb[0].mxu0
      %v2240 = vadd.f32 %v2079, %v2239
      %v2241 = vpop.f32.mrb[0].mxu0
      %v2242 = vpop.f32.mrb[0].mxu0
      %v2243 = vadd.f32 %v2082, %v2242
      %v2244 = vpop.f32.mrb[0].mxu0
      %2245 = vmatprep.mubr.bf16.mxu0 0
      %2246 = vmatmul.mubr.bf16.gmra.mrb[0].mxu0 %v601
      %v2247 = vpop.f32.mrb[0].mxu0
      %v2248 = vadd.f32 %v2087, %v2247
      %v2249 = vpop.f32.mrb[0].mxu0
      %v2250 = vpop.f32.mrb[0].mxu0
      %v2251 = vadd.f32 %v2090, %v2250
      %v2252 = vpop.f32.mrb[0].mxu0
      %2253 = vmatprep.mubr.bf16.mxu0 0
      %2254 = vmatmul.mubr.bf16.gmra.mrb[0].mxu0 %v602
      %v2255 = vpop.f32.mrb[0].mxu0
      %v2256 = vadd.f32 %v2095, %v2255
      %v2257 = vpop.f32.mrb[0].mxu0
      %v2258 = vpop.f32.mrb[0].mxu0
      %v2259 = vadd.f32 %v2098, %v2258
      %v2260 = vpop.f32.mrb[0].mxu0
      %2261 = vmatprep.mubr.bf16.mxu0 0
      %2262 = vmatmul.mubr.bf16.gmra.mrb[0].mxu0 %v603
      %v2263 = vpop.f32.mrb[0].mxu0
      %v2264 = vadd.f32 %v2103, %v2263
      %v2265 = vpop.f32.mrb[0].mxu0
      %v2266 = vpop.f32.mrb[0].mxu0
      %v2267 = vadd.f32 %v2106, %v2266
      %v2268 = vpop.f32.mrb[0].mxu0
      %2269 = vmatprep.mubr.bf16.mxu0 0
      %2270 = vmatmul.mubr.bf16.gmra.mrb[0].mxu0 %v604
      %v2271 = vpop.f32.mrb[0].mxu0
      %v2272 = vadd.f32 %v2111, %v2271
      %v2273 = vpop.f32.mrb[0].mxu0
      %v2274 = vpop.f32.mrb[0].mxu0
      %v2275 = vadd.f32 %v2114, %v2274
      %v2276 = vpop.f32.mrb[0].mxu0
      %2277 = vmatprep.mubr.bf16.mxu0 0
      %2278 = vmatmul.mubr.bf16.gmra.mrb[0].mxu0 %v605
      %v2279 = vpop.f32.mrb[0].mxu0
      %v2280 = vadd.f32 %v2119, %v2279
      %v2281 = vpop.f32.mrb[0].mxu0
      %v2282 = vpop.f32.mrb[0].mxu0
      %v2283 = vadd.f32 %v2122, %v2282
      %v2284 = vpop.f32.mrb[0].mxu0
      %2285 = vmatprep.mubr.bf16.mxu0 0
      %2286 = vmatmul.mubr.bf16.gmra.mrb[0].mxu0 0
      %v2287 = vpop.f32.mrb[0].mxu0
      %v2288 = vadd.f32 %v2127, %v2287
      %v2289 = vpop.f32.mrb[0].mxu0
      %v2290 = vpop.f32.mrb[0].mxu0
      %v2291 = vadd.f32 %v2130, %v2290
      %v2292 = vpop.f32.mrb[0].mxu0
      %2293 = vdwg.mxu0
      %v2294 = vld [vmem:[#allocation2] sm:$0xff]
      %v2295 = vld [vmem:[#allocation2 + $0x8] sm:$0xff]
      %v2296 = vld [vmem:[#allocation2 + $0x10] sm:$0xff]
      %v2297 = vld [vmem:[#allocation2 + $0x18] sm:$0xff]
      %v2298 = vld [vmem:[#allocation2 + $0x20] sm:$0xff]
      %v2299 = vld [vmem:[#allocation2 + $0x28] sm:$0xff]
      %v2300 = vld [vmem:[#allocation2 + $0x30] sm:$0xff]
      %v2301 = vld [vmem:[#allocation2 + $0x38] sm:$0xff]
      %v2302 = vld [vmem:[#allocation2 + $0x40] sm:$0xff]
      %v2303 = vld [vmem:[#allocation2 + $0x48] sm:$0xff]
      %v2304 = vld [vmem:[#allocation2 + $0x50] sm:$0xff]
      %v2305 = vld [vmem:[#allocation2 + $0x58] sm:$0xff]
      %v2306 = vld [vmem:[#allocation2 + $0x60] sm:$0xff]
      %v2307 = vld [vmem:[#allocation2 + $0x68] sm:$0xff]
      %v2308 = vld [vmem:[#allocation2 + $0x70] sm:$0xff]
      %v2309 = vld [vmem:[#allocation2 + $0x78] sm:$0xff]
      %v2310 = vld [vmem:[#allocation2 + $0x80] sm:$0xff]
      %v2311 = vld [vmem:[#allocation2 + $0x88] sm:$0xff]
      %v2312 = vld [vmem:[#allocation2 + $0x90] sm:$0xff]
      %v2313 = vld [vmem:[#allocation2 + $0x98] sm:$0xff]
      %v2314 = vld [vmem:[#allocation2 + $0xa0] sm:$0xff]
      %v2315 = vld [vmem:[#allocation2 + $0xa8] sm:$0xff]
      %v2316 = vld [vmem:[#allocation2 + $0xb0] sm:$0xff]
      %v2317 = vld [vmem:[#allocation2 + $0xb8] sm:$0xff]
      %v2318 = vld [vmem:[#allocation2 + $0xc0] sm:$0xff]
      %v2319 = vld [vmem:[#allocation2 + $0xc8] sm:$0xff]
      %v2320 = vld [vmem:[#allocation2 + $0xd0] sm:$0xff]
      %v2321 = vld [vmem:[#allocation2 + $0xd8] sm:$0xff]
      %v2322 = vld [vmem:[#allocation2 + $0xe0] sm:$0xff]
      %v2323 = vld [vmem:[#allocation2 + $0xe8] sm:$0xff]
      %v2324 = vld [vmem:[#allocation2 + $0xf0] sm:$0xff]
      %v2325 = vld [vmem:[#allocation2 + $0xf8] sm:$0xff]
      %v2326 = vadd.f32 %v2294, %v2168
      %v2327 = vadd.f32 %v2295, %v2171
      %v2328 = vadd.f32 %v2296, %v2176
      %v2329 = vadd.f32 %v2297, %v2179
      %v2330 = vadd.f32 %v2298, %v2184
      %v2331 = vadd.f32 %v2299, %v2187
      %v2332 = vadd.f32 %v2300, %v2192
      %v2333 = vadd.f32 %v2301, %v2195
      %v2334 = vadd.f32 %v2302, %v2200
      %v2335 = vadd.f32 %v2303, %v2203
      %v2336 = vadd.f32 %v2304, %v2208
      %v2337 = vadd.f32 %v2305, %v2211
      %v2338 = vadd.f32 %v2306, %v2216
      %v2339 = vadd.f32 %v2307, %v2219
      %v2340 = vadd.f32 %v2308, %v2224
      %v2341 = vadd.f32 %v2309, %v2227
      %v2342 = vadd.f32 %v2310, %v2232
      %v2343 = vadd.f32 %v2311, %v2235
      %v2344 = vadd.f32 %v2312, %v2240
      %v2345 = vadd.f32 %v2313, %v2243
      %v2346 = vadd.f32 %v2314, %v2248
      %v2347 = vadd.f32 %v2315, %v2251
      %v2348 = vadd.f32 %v2316, %v2256
      %v2349 = vadd.f32 %v2317, %v2259
      %v2350 = vadd.f32 %v2318, %v2264
      %v2351 = vadd.f32 %v2319, %v2267
      %v2352 = vadd.f32 %v2320, %v2272
      %v2353 = vadd.f32 %v2321, %v2275
      %v2354 = vadd.f32 %v2322, %v2280
      %v2355 = vadd.f32 %v2323, %v2283
      %v2356 = vadd.f32 %v2324, %v2288
      %v2357 = vadd.f32 %v2325, %v2291
      %2358 = vst [vmem:[#allocation2] sm:$0xff] %v2326
      %2359 = vst [vmem:[#allocation2 + $0x8] sm:$0xff] %v2327
      %2360 = vst [vmem:[#allocation2 + $0x10] sm:$0xff] %v2328
      %2361 = vst [vmem:[#allocation2 + $0x18] sm:$0xff] %v2329
      %2362 = vst [vmem:[#allocation2 + $0x20] sm:$0xff] %v2330
      %2363 = vst [vmem:[#allocation2 + $0x28] sm:$0xff] %v2331
      %2364 = vst [vmem:[#allocation2 + $0x30] sm:$0xff] %v2332
      %2365 = vst [vmem:[#allocation2 + $0x38] sm:$0xff] %v2333
      %2366 = vst [vmem:[#allocation2 + $0x40] sm:$0xff] %v2334
      %2367 = vst [vmem:[#allocation2 + $0x48] sm:$0xff] %v2335
      %2368 = vst [vmem:[#allocation2 + $0x50] sm:$0xff] %v2336
      %2369 = vst [vmem:[#allocation2 + $0x58] sm:$0xff] %v2337
      %2370 = vst [vmem:[#allocation2 + $0x60] sm:$0xff] %v2338
      %2371 = vst [vmem:[#allocation2 + $0x68] sm:$0xff] %v2339
      %2372 = vst [vmem:[#allocation2 + $0x70] sm:$0xff] %v2340
      %2373 = vst [vmem:[#allocation2 + $0x78] sm:$0xff] %v2341
      %2374 = vst [vmem:[#allocation2 + $0x80] sm:$0xff] %v2342
      %2375 = vst [vmem:[#allocation2 + $0x88] sm:$0xff] %v2343
      %2376 = vst [vmem:[#allocation2 + $0x90] sm:$0xff] %v2344
      %2377 = vst [vmem:[#allocation2 + $0x98] sm:$0xff] %v2345
      %2378 = vst [vmem:[#allocation2 + $0xa0] sm:$0xff] %v2346
      %2379 = vst [vmem:[#allocation2 + $0xa8] sm:$0xff] %v2347
      %2380 = vst [vmem:[#allocation2 + $0xb0] sm:$0xff] %v2348
      %2381 = vst [vmem:[#allocation2 + $0xb8] sm:$0xff] %v2349
      %2382 = vst [vmem:[#allocation2 + $0xc0] sm:$0xff] %v2350
      %2383 = vst [vmem:[#allocation2 + $0xc8] sm:$0xff] %v2351
      %2384 = vst [vmem:[#allocation2 + $0xd0] sm:$0xff] %v2352
      %2385 = vst [vmem:[#allocation2 + $0xd8] sm:$0xff] %v2353
      %2386 = vst [vmem:[#allocation2 + $0xe0] sm:$0xff] %v2354
      %2387 = vst [vmem:[#allocation2 + $0xe8] sm:$0xff] %v2355
      %2388 = vst [vmem:[#allocation2 + $0xf0] sm:$0xff] %v2356
      %2389 = vst [vmem:[#allocation2 + $0xf8] sm:$0xff] %v2357
      %v2390 = vld [vmem:[#allocation2] sm:$0xff]
      %v2391 = vld [vmem:[#allocation2 + $0x8] sm:$0xff]
      %v2392 = vld [vmem:[#allocation2 + $0x10] sm:$0xff]
      %v2393 = vld [vmem:[#allocation2 + $0x18] sm:$0xff]
      %v2394 = vld [vmem:[#allocation2 + $0x20] sm:$0xff]
      %v2395 = vld [vmem:[#allocation2 + $0x28] sm:$0xff]
      %v2396 = vld [vmem:[#allocation2 + $0x30] sm:$0xff]
      %v2397 = vld [vmem:[#allocation2 + $0x38] sm:$0xff]
      %v2398 = vld [vmem:[#allocation2 + $0x40] sm:$0xff]
      %v2399 = vld [vmem:[#allocation2 + $0x48] sm:$0xff]
      %v2400 = vld [vmem:[#allocation2 + $0x50] sm:$0xff]
      %v2401 = vld [vmem:[#allocation2 + $0x58] sm:$0xff]
      %v2402 = vld [vmem:[#allocation2 + $0x60] sm:$0xff]
      %v2403 = vld [vmem:[#allocation2 + $0x68] sm:$0xff]
      %v2404 = vld [vmem:[#allocation2 + $0x70] sm:$0xff]
      %v2405 = vld [vmem:[#allocation2 + $0x78] sm:$0xff]
      %v2406 = vld [vmem:[#allocation2 + $0x80] sm:$0xff]
      %v2407 = vld [vmem:[#allocation2 + $0x88] sm:$0xff]
      %v2408 = vld [vmem:[#allocation2 + $0x90] sm:$0xff]
      %v2409 = vld [vmem:[#allocation2 + $0x98] sm:$0xff]
      %v2410 = vld [vmem:[#allocation2 + $0xa0] sm:$0xff]
      %v2411 = vld [vmem:[#allocation2 + $0xa8] sm:$0xff]
      %v2412 = vld [vmem:[#allocation2 + $0xb0] sm:$0xff]
      %v2413 = vld [vmem:[#allocation2 + $0xb8] sm:$0xff]
      %v2414 = vld [vmem:[#allocation2 + $0xc0] sm:$0xff]
      %v2415 = vld [vmem:[#allocation2 + $0xc8] sm:$0xff]
      %v2416 = vld [vmem:[#allocation2 + $0xd0] sm:$0xff]
      %v2417 = vld [vmem:[#allocation2 + $0xd8] sm:$0xff]
      %v2418 = vld [vmem:[#allocation2 + $0xe0] sm:$0xff]
      %v2419 = vld [vmem:[#allocation2 + $0xe8] sm:$0xff]
      %v2420 = vld [vmem:[#allocation2 + $0xf0] sm:$0xff]
      %v2421 = vld [vmem:[#allocation2 + $0xf8] sm:$0xff]
      %v2422 = vld [vmem:[%s2] sm:$0x1]
      %v2424 = vlaneseq
      %v2425 = vshrl.u32 %v2424, 7
      %v2426 = vsub.s32 0, %v2425
      %v2427 = vrot.slane %v2422, %v2426
      %v2429 = vmul.f32 %v2390, %v2427
      %v2430 = vmul.f32 %v2391, %v2427
      %v2431 = vmul.f32 %v2392, %v2427
      %v2432 = vmul.f32 %v2393, %v2427
      %v2433 = vmul.f32 %v2394, %v2427
      %v2434 = vmul.f32 %v2395, %v2427
      %v2435 = vmul.f32 %v2396, %v2427
      %v2436 = vmul.f32 %v2397, %v2427
      %v2437 = vmul.f32 %v2398, %v2427
      %v2438 = vmul.f32 %v2399, %v2427
      %v2439 = vmul.f32 %v2400, %v2427
      %v2440 = vmul.f32 %v2401, %v2427
      %v2441 = vmul.f32 %v2402, %v2427
      %v2442 = vmul.f32 %v2403, %v2427
      %v2443 = vmul.f32 %v2404, %v2427
      %v2444 = vmul.f32 %v2405, %v2427
      %v2445 = vmul.f32 %v2406, %v2427
      %v2446 = vmul.f32 %v2407, %v2427
      %v2447 = vmul.f32 %v2408, %v2427
      %v2448 = vmul.f32 %v2409, %v2427
      %v2449 = vmul.f32 %v2410, %v2427
      %v2450 = vmul.f32 %v2411, %v2427
      %v2451 = vmul.f32 %v2412, %v2427
      %v2452 = vmul.f32 %v2413, %v2427
      %v2453 = vmul.f32 %v2414, %v2427
      %v2454 = vmul.f32 %v2415, %v2427
      %v2455 = vmul.f32 %v2416, %v2427
      %v2456 = vmul.f32 %v2417, %v2427
      %v2457 = vmul.f32 %v2418, %v2427
      %v2458 = vmul.f32 %v2419, %v2427
      %v2459 = vmul.f32 %v2420, %v2427
      %v2460 = vmul.f32 %v2421, %v2427
      %v2461 = vld [vmem:[%s3] sm:$0x1]
      %v2463 = vlaneseq
      %v2464 = vshrl.u32 %v2463, 7
      %v2465 = vsub.s32 0, %v2464
      %v2466 = vrot.slane %v2461, %v2465
      %v2468 = vadd.f32 %v2429, %v2466
      %v2469 = vadd.f32 %v2430, %v2466
      %v2470 = vadd.f32 %v2431, %v2466
      %v2471 = vadd.f32 %v2432, %v2466
      %v2472 = vadd.f32 %v2433, %v2466
      %v2473 = vadd.f32 %v2434, %v2466
      %v2474 = vadd.f32 %v2435, %v2466
      %v2475 = vadd.f32 %v2436, %v2466
      %v2476 = vadd.f32 %v2437, %v2466
      %v2477 = vadd.f32 %v2438, %v2466
      %v2478 = vadd.f32 %v2439, %v2466
      %v2479 = vadd.f32 %v2440, %v2466
      %v2480 = vadd.f32 %v2441, %v2466
      %v2481 = vadd.f32 %v2442, %v2466
      %v2482 = vadd.f32 %v2443, %v2466
      %v2483 = vadd.f32 %v2444, %v2466
      %v2484 = vadd.f32 %v2445, %v2466
      %v2485 = vadd.f32 %v2446, %v2466
      %v2486 = vadd.f32 %v2447, %v2466
      %v2487 = vadd.f32 %v2448, %v2466
      %v2488 = vadd.f32 %v2449, %v2466
      %v2489 = vadd.f32 %v2450, %v2466
      %v2490 = vadd.f32 %v2451, %v2466
      %v2491 = vadd.f32 %v2452, %v2466
      %v2492 = vadd.f32 %v2453, %v2466
      %v2493 = vadd.f32 %v2454, %v2466
      %v2494 = vadd.f32 %v2455, %v2466
      %v2495 = vadd.f32 %v2456, %v2466
      %v2496 = vadd.f32 %v2457, %v2466
      %v2497 = vadd.f32 %v2458, %v2466
      %v2498 = vadd.f32 %v2459, %v2466
      %v2499 = vadd.f32 %v2460, %v2466
      %v2500 = vmax.f32 %v2468, 0.0
      %v2501 = vmax.f32 %v2469, 0.0
      %v2502 = vmax.f32 %v2470, 0.0
      %v2503 = vmax.f32 %v2471, 0.0
      %v2504 = vmax.f32 %v2472, 0.0
      %v2505 = vmax.f32 %v2473, 0.0
      %v2506 = vmax.f32 %v2474, 0.0
      %v2507 = vmax.f32 %v2475, 0.0
      %v2508 = vmax.f32 %v2476, 0.0
      %v2509 = vmax.f32 %v2477, 0.0
      %v2510 = vmax.f32 %v2478, 0.0
      %v2511 = vmax.f32 %v2479, 0.0
      %v2512 = vmax.f32 %v2480, 0.0
      %v2513 = vmax.f32 %v2481, 0.0
      %v2514 = vmax.f32 %v2482, 0.0
      %v2515 = vmax.f32 %v2483, 0.0
      %v2516 = vmax.f32 %v2484, 0.0
      %v2517 = vmax.f32 %v2485, 0.0
      %v2518 = vmax.f32 %v2486, 0.0
      %v2519 = vmax.f32 %v2487, 0.0
      %v2520 = vmax.f32 %v2488, 0.0
      %v2521 = vmax.f32 %v2489, 0.0
      %v2522 = vmax.f32 %v2490, 0.0
      %v2523 = vmax.f32 %v2491, 0.0
      %v2524 = vmax.f32 %v2492, 0.0
      %v2525 = vmax.f32 %v2493, 0.0
      %v2526 = vmax.f32 %v2494, 0.0
      %v2527 = vmax.f32 %v2495, 0.0
      %v2528 = vmax.f32 %v2496, 0.0
      %v2529 = vmax.f32 %v2497, 0.0
      %v2530 = vmax.f32 %v2498, 0.0
      %v2531 = vmax.f32 %v2499, 0.0
      %2532 = vst [vmem:[#allocation2] sm:$0xff] %v2500
      %2533 = vst [vmem:[#allocation2 + $0x8] sm:$0xff] %v2501
      %2534 = vst [vmem:[#allocation2 + $0x10] sm:$0xff] %v2502
      %2535 = vst [vmem:[#allocation2 + $0x18] sm:$0xff] %v2503
      %2536 = vst [vmem:[#allocation2 + $0x20] sm:$0xff] %v2504
      %2537 = vst [vmem:[#allocation2 + $0x28] sm:$0xff] %v2505
      %2538 = vst [vmem:[#allocation2 + $0x30] sm:$0xff] %v2506
      %2539 = vst [vmem:[#allocation2 + $0x38] sm:$0xff] %v2507
      %2540 = vst [vmem:[#allocation2 + $0x40] sm:$0xff] %v2508
      %2541 = vst [vmem:[#allocation2 + $0x48] sm:$0xff] %v2509
      %2542 = vst [vmem:[#allocation2 + $0x50] sm:$0xff] %v2510
      %2543 = vst [vmem:[#allocation2 + $0x58] sm:$0xff] %v2511
      %2544 = vst [vmem:[#allocation2 + $0x60] sm:$0xff] %v2512
      %2545 = vst [vmem:[#allocation2 + $0x68] sm:$0xff] %v2513
      %2546 = vst [vmem:[#allocation2 + $0x70] sm:$0xff] %v2514
      %2547 = vst [vmem:[#allocation2 + $0x78] sm:$0xff] %v2515
      %2548 = vst [vmem:[#allocation2 + $0x80] sm:$0xff] %v2516
      %2549 = vst [vmem:[#allocation2 + $0x88] sm:$0xff] %v2517
      %2550 = vst [vmem:[#allocation2 + $0x90] sm:$0xff] %v2518
      %2551 = vst [vmem:[#allocation2 + $0x98] sm:$0xff] %v2519
      %2552 = vst [vmem:[#allocation2 + $0xa0] sm:$0xff] %v2520
      %2553 = vst [vmem:[#allocation2 + $0xa8] sm:$0xff] %v2521
      %2554 = vst [vmem:[#allocation2 + $0xb0] sm:$0xff] %v2522
      %2555 = vst [vmem:[#allocation2 + $0xb8] sm:$0xff] %v2523
      %2556 = vst [vmem:[#allocation2 + $0xc0] sm:$0xff] %v2524
      %2557 = vst [vmem:[#allocation2 + $0xc8] sm:$0xff] %v2525
      %2558 = vst [vmem:[#allocation2 + $0xd0] sm:$0xff] %v2526
      %2559 = vst [vmem:[#allocation2 + $0xd8] sm:$0xff] %v2527
      %2560 = vst [vmem:[#allocation2 + $0xe0] sm:$0xff] %v2528
      %2561 = vst [vmem:[#allocation2 + $0xe8] sm:$0xff] %v2529
      %2562 = vst [vmem:[#allocation2 + $0xf0] sm:$0xff] %v2530
      %2563 = vst [vmem:[#allocation2 + $0xf8] sm:$0xff] %v2531
      %v2564 = vld [vmem:[#allocation2] sm:$0xff]
      %v2565 = vld [vmem:[#allocation2 + $0x8] sm:$0xff]
      %v2566 = vld [vmem:[#allocation2 + $0x10] sm:$0xff]
      %v2567 = vld [vmem:[#allocation2 + $0x18] sm:$0xff]
      %v2568 = vld [vmem:[#allocation2 + $0x20] sm:$0xff]
      %v2569 = vld [vmem:[#allocation2 + $0x28] sm:$0xff]
      %v2570 = vld [vmem:[#allocation2 + $0x30] sm:$0xff]
      %v2571 = vld [vmem:[#allocation2 + $0x38] sm:$0xff]
      %v2572 = vld [vmem:[#allocation2 + $0x40] sm:$0xff]
      %v2573 = vld [vmem:[#allocation2 + $0x48] sm:$0xff]
      %v2574 = vld [vmem:[#allocation2 + $0x50] sm:$0xff]
      %v2575 = vld [vmem:[#allocation2 + $0x58] sm:$0xff]
      %v2576 = vld [vmem:[#allocation2 + $0x60] sm:$0xff]
      %v2577 = vld [vmem:[#allocation2 + $0x68] sm:$0xff]
      %v2578 = vld [vmem:[#allocation2 + $0x70] sm:$0xff]
      %v2579 = vld [vmem:[#allocation2 + $0x78] sm:$0xff]
      %v2580 = vld [vmem:[#allocation2 + $0x80] sm:$0xff]
      %v2581 = vld [vmem:[#allocation2 + $0x88] sm:$0xff]
      %v2582 = vld [vmem:[#allocation2 + $0x90] sm:$0xff]
      %v2583 = vld [vmem:[#allocation2 + $0x98] sm:$0xff]
      %v2584 = vld [vmem:[#allocation2 + $0xa0] sm:$0xff]
      %v2585 = vld [vmem:[#allocation2 + $0xa8] sm:$0xff]
      %v2586 = vld [vmem:[#allocation2 + $0xb0] sm:$0xff]
      %v2587 = vld [vmem:[#allocation2 + $0xb8] sm:$0xff]
      %v2588 = vld [vmem:[#allocation2 + $0xc0] sm:$0xff]
      %v2589 = vld [vmem:[#allocation2 + $0xc8] sm:$0xff]
      %v2590 = vld [vmem:[#allocation2 + $0xd0] sm:$0xff]
      %v2591 = vld [vmem:[#allocation2 + $0xd8] sm:$0xff]
      %v2592 = vld [vmem:[#allocation2 + $0xe0] sm:$0xff]
      %v2593 = vld [vmem:[#allocation2 + $0xe8] sm:$0xff]
      %v2594 = vld [vmem:[#allocation2 + $0xf0] sm:$0xff]
      %v2595 = vld [vmem:[#allocation2 + $0xf8] sm:$0xff]
      %v2596 = vadd.f32 %v2564, %v2565
      %v2597 = vadd.f32 %v2596, %v2566
      %v2598 = vadd.f32 %v2597, %v2567
      %v2599 = vadd.f32 %v2598, %v2568
      %v2600 = vadd.f32 %v2599, %v2569
      %v2601 = vadd.f32 %v2600, %v2570
      %v2602 = vadd.f32 %v2601, %v2571
      %v2603 = vadd.f32 %v2602, %v2572
      %v2604 = vadd.f32 %v2603, %v2573
      %v2605 = vadd.f32 %v2604, %v2574
      %v2606 = vadd.f32 %v2605, %v2575
      %v2607 = vadd.f32 %v2606, %v2576
      %v2608 = vadd.f32 %v2607, %v2577
      %v2609 = vadd.f32 %v2608, %v2578
      %v2610 = vadd.f32 %v2609, %v2579
      %v2611 = vadd.f32 %v2610, %v2580
      %v2612 = vadd.f32 %v2611, %v2581
      %v2613 = vadd.f32 %v2612, %v2582
      %v2614 = vadd.f32 %v2613, %v2583
      %v2615 = vadd.f32 %v2614, %v2584
      %v2616 = vadd.f32 %v2615, %v2585
      %v2617 = vadd.f32 %v2616, %v2586
      %v2618 = vadd.f32 %v2617, %v2587
      %v2619 = vadd.f32 %v2618, %v2588
      %v2620 = vadd.f32 %v2619, %v2589
      %v2621 = vadd.f32 %v2620, %v2590
      %v2622 = vadd.f32 %v2621, %v2591
      %v2623 = vadd.f32 %v2622, %v2592
      %v2624 = vadd.f32 %v2623, %v2593
      %v2625 = vadd.f32 %v2624, %v2594
      %v2626 = vadd.f32 %v2625, %v2595
      %v2627 = vrot.slane %v2626, 4
      %v2628 = vadd.f32 %v2626, %v2627
      %v2629 = vrot.slane %v2628, 2
      %v2630 = vadd.f32 %v2628, %v2629
      %v2631 = vrot.slane %v2630, 1
      %v2632 = vadd.f32 %v2630, %v2631
      %v2633 = vmul.f32 %v2632, 0.00390625
      %v2634 = vpack.c.bf16 %v2633, %v2633
      %v2635 = vld [vmem:[%s4] sm:$0xf]
      %v2636 = vld [vmem:[%s4 + $0x4] sm:$0xf]
      %v2637 = vld [vmem:[%s4 + $0x8] sm:$0xf]
      %v2638 = vld [vmem:[%s4 + $0xc] sm:$0xf]
      %v2639 = vld [vmem:[%s4 + $0x10] sm:$0xf]
      %v2640 = vld [vmem:[%s4 + $0x14] sm:$0xf]
      %v2641 = vld [vmem:[%s4 + $0x18] sm:$0xf]
      %v2642 = vld [vmem:[%s4 + $0x1c] sm:$0xf]
      %v2643 = vld [vmem:[%s4 + $0x20] sm:$0xf]
      %v2644 = vld [vmem:[%s4 + $0x24] sm:$0xf]
      %v2645 = vld [vmem:[%s4 + $0x28] sm:$0xf]
      %v2646 = vld [vmem:[%s4 + $0x2c] sm:$0xf]
      %v2647 = vld [vmem:[%s4 + $0x30] sm:$0xf]
      %v2648 = vld [vmem:[%s4 + $0x34] sm:$0xf]
      %v2649 = vld [vmem:[%s4 + $0x38] sm:$0xf]
      %v2650 = vld [vmem:[%s4 + $0x3c] sm:$0xf]
      %v2667 = vunpack.c.l.b16 %v2635
      %v2668 = vunpack.c.l.b16 %v2636
      %v2669 = vunpack.c.l.b16 %v2637
      %v2670 = vunpack.c.l.b16 %v2638
      %v2671 = vunpack.c.l.b16 %v2639
      %v2672 = vunpack.c.l.b16 %v2640
      %v2673 = vunpack.c.l.b16 %v2641
      %v2674 = vunpack.c.l.b16 %v2642
      %v2675 = vunpack.c.l.b16 %v2643
      %v2676 = vunpack.c.l.b16 %v2644
      %v2677 = vunpack.c.l.b16 %v2645
      %v2678 = vunpack.c.l.b16 %v2646
      %v2679 = vunpack.c.l.b16 %v2647
      %v2680 = vunpack.c.l.b16 %v2648
      %v2681 = vunpack.c.l.b16 %v2649
      %v2682 = vunpack.c.l.b16 %v2650
      %v2683 = vpack.c.b16 %v2668, %v2667
      %v2684 = vpack.c.b16 %v2670, %v2669
      %v2685 = vpack.c.b16 %v2672, %v2671
      %v2686 = vpack.c.b16 %v2674, %v2673
      %v2687 = vpack.c.b16 %v2676, %v2675
      %v2688 = vpack.c.b16 %v2678, %v2677
      %v2689 = vpack.c.b16 %v2680, %v2679
      %v2690 = vpack.c.b16 %v2682, %v2681
      %2699 = vmatprep.subr.bf16.mxu0 0
      %2700 = vmatpush1.bf16.msra.mxu0 %v2683
      %2701 = vmatprep.subr.bf16.mxu0 0
      %2702 = vmatpush1.bf16.msra.mxu0 %v2684
      %2703 = vmatprep.subr.bf16.mxu0 0
      %2704 = vmatpush1.bf16.msra.mxu0 %v2685
      %2705 = vmatprep.subr.bf16.mxu0 0
      %2706 = vmatpush1.bf16.msra.mxu0 %v2686
      %2707 = vmatprep.subr.bf16.mxu0 0
      %2708 = vmatpush1.bf16.msra.mxu0 %v2687
      %2709 = vmatprep.subr.bf16.mxu0 0
      %2710 = vmatpush1.bf16.msra.mxu0 %v2688
      %2711 = vmatprep.subr.bf16.mxu0 0
      %2712 = vmatpush1.bf16.msra.mxu0 %v2689
      %2713 = vmatprep.subr.bf16.mxu0 0
      %2714 = vmatpush1.bf16.msra.mxu0 %v2690
      %2715 = vmatprep.subr.bf16.mxu0 0
      %2716 = vmatpush1.bf16.msra.mxu0 0
      %2717 = vmatprep.subr.bf16.mxu0 0
      %2718 = vmatpush1.bf16.msra.mxu0 0
      %2719 = vmatprep.subr.bf16.mxu0 0
      %2720 = vmatpush1.bf16.msra.mxu0 0
      %2721 = vmatprep.subr.bf16.mxu0 0
      %2722 = vmatpush1.bf16.msra.mxu0 0
      %2723 = vmatprep.subr.bf16.mxu0 0
      %2724 = vmatpush1.bf16.msra.mxu0 0
      %2725 = vmatprep.subr.bf16.mxu0 0
      %2726 = vmatpush1.bf16.msra.mxu0 0
      %2727 = vmatprep.subr.bf16.mxu0 0
      %2728 = vmatpush1.bf16.msra.mxu0 0
      %2729 = vmatprep.subr.bf16.mxu0 0
      %2730 = vmatpush1.bf16.msra.mxu0 0
      %2731 = vmatprep.mubr.bf16.mxu0 0
      %2732 = vmatmul.mubr.bf16.gmra.mrb[0].mxu0 %v2634
      %v2733 = vpop.f32.mrb[0].mxu0
      %v2734 = vadd.f32 0.0, %v2733
      %v2735 = vpop.f32.mrb[0].mxu0
      %v2736 = vpop.f32.mrb[0].mxu0
      %v2737 = vpop.f32.mrb[0].mxu0
      %2738 = vdwg.mxu0
      %v2739 = vld [vmem:[%s5] sm:$0x1]
      %v2740 = vmul.f32 %v2734, %v2739
      %v2741 = vld [vmem:[%s6] sm:$0x1]
      %v2742 = vadd.f32 %v2740, %v2741
      %v2743 = vsub.f32 0.0, %v2742
      %v2744 = vmul.f32 %v2743, 1.442695
      %v2745 = vpow.pop %v2744
      %v2746 = vadd.f32 %v2745, 1.0
      %v2747 = vrcp.pop %v2746
      %v2748 = vmul.f32 1.0, %v2747
      %v2749 = vlaneseq
      %v2750 = vshrl.u32 %v2749, 7
      %v2751 = vsub.s32 0, %v2750
      %v2752 = vrot.slane %v2748, %v2751
      %v2753 = vmul.f32 %v2564, %v2752
      %v2754 = vmul.f32 %v2565, %v2752
      %v2755 = vmul.f32 %v2566, %v2752
      %v2756 = vmul.f32 %v2567, %v2752
      %v2757 = vmul.f32 %v2568, %v2752
      %v2758 = vmul.f32 %v2569, %v2752
      %v2759 = vmul.f32 %v2570, %v2752
      %v2760 = vmul.f32 %v2571, %v2752
      %v2761 = vmul.f32 %v2572, %v2752
      %v2762 = vmul.f32 %v2573, %v2752
      %v2763 = vmul.f32 %v2574, %v2752
      %v2764 = vmul.f32 %v2575, %v2752
      %v2765 = vmul.f32 %v2576, %v2752
      %v2766 = vmul.f32 %v2577, %v2752
      %v2767 = vmul.f32 %v2578, %v2752
      %v2768 = vmul.f32 %v2579, %v2752
      %v2769 = vmul.f32 %v2580, %v2752
      %v2770 = vmul.f32 %v2581, %v2752
      %v2771 = vmul.f32 %v2582, %v2752
      %v2772 = vmul.f32 %v2583, %v2752
      %v2773 = vmul.f32 %v2584, %v2752
      %v2774 = vmul.f32 %v2585, %v2752
      %v2775 = vmul.f32 %v2586, %v2752
      %v2776 = vmul.f32 %v2587, %v2752
      %v2777 = vmul.f32 %v2588, %v2752
      %v2778 = vmul.f32 %v2589, %v2752
      %v2779 = vmul.f32 %v2590, %v2752
      %v2780 = vmul.f32 %v2591, %v2752
      %v2781 = vmul.f32 %v2592, %v2752
      %v2782 = vmul.f32 %v2593, %v2752
      %v2783 = vmul.f32 %v2594, %v2752
      %v2784 = vmul.f32 %v2595, %v2752
      %2785 = vst [vmem:[%s278] sm:$0xff] %v2753
      %2786 = vst [vmem:[%s278 + $0x8] sm:$0xff] %v2754
      %2787 = vst [vmem:[%s278 + $0x10] sm:$0xff] %v2755
      %2788 = vst [vmem:[%s278 + $0x18] sm:$0xff] %v2756
      %2789 = vst [vmem:[%s278 + $0x20] sm:$0xff] %v2757
      %2790 = vst [vmem:[%s278 + $0x28] sm:$0xff] %v2758
      %2791 = vst [vmem:[%s278 + $0x30] sm:$0xff] %v2759
      %2792 = vst [vmem:[%s278 + $0x38] sm:$0xff] %v2760
      %2793 = vst [vmem:[%s278 + $0x40] sm:$0xff] %v2761
      %2794 = vst [vmem:[%s278 + $0x48] sm:$0xff] %v2762
      %2795 = vst [vmem:[%s278 + $0x50] sm:$0xff] %v2763
      %2796 = vst [vmem:[%s278 + $0x58] sm:$0xff] %v2764
      %2797 = vst [vmem:[%s278 + $0x60] sm:$0xff] %v2765
      %2798 = vst [vmem:[%s278 + $0x68] sm:$0xff] %v2766
      %2799 = vst [vmem:[%s278 + $0x70] sm:$0xff] %v2767
      %2800 = vst [vmem:[%s278 + $0x78] sm:$0xff] %v2768
      %2801 = vst [vmem:[%s278 + $0x80] sm:$0xff] %v2769
      %2802 = vst [vmem:[%s278 + $0x88] sm:$0xff] %v2770
      %2803 = vst [vmem:[%s278 + $0x90] sm:$0xff] %v2771
      %2804 = vst [vmem:[%s278 + $0x98] sm:$0xff] %v2772
      %2805 = vst [vmem:[%s278 + $0xa0] sm:$0xff] %v2773
      %2806 = vst [vmem:[%s278 + $0xa8] sm:$0xff] %v2774
      %2807 = vst [vmem:[%s278 + $0xb0] sm:$0xff] %v2775
      %2808 = vst [vmem:[%s278 + $0xb8] sm:$0xff] %v2776
      %2809 = vst [vmem:[%s278 + $0xc0] sm:$0xff] %v2777
      %2810 = vst [vmem:[%s278 + $0xc8] sm:$0xff] %v2778
      %2811 = vst [vmem:[%s278 + $0xd0] sm:$0xff] %v2779
      %2812 = vst [vmem:[%s278 + $0xd8] sm:$0xff] %v2780
      %2813 = vst [vmem:[%s278 + $0xe0] sm:$0xff] %v2781
      %2814 = vst [vmem:[%s278 + $0xe8] sm:$0xff] %v2782
      %2815 = vst [vmem:[%s278 + $0xf0] sm:$0xff] %v2783
      %2816 = vst [vmem:[%s278 + $0xf8] sm:$0xff] %v2784
      %p2817 = scmp.lt.s32.totalorder %s18, 1
      %s2818 = scalar_select %p2817, %s18, 1
      %s2819 = smul.addr %s2818, 32
      %s2820 = smul.addr %s2819, 8
      %s2821 = scalar_lea.vmem %s7, %s2820
      // Predicated region
      $region49: #{attention_refinement_nhwc.1} parent=47 // pred_check
        %p2822 = pneg %p188
      $region50: #{attention_refinement_nhwc.1} parent=47 // pred_check_branch
        %2824 = sbr.rel (%p2822) target = $region52
      $region51: #{attention_refinement_nhwc.1} parent=47 // pred_region
        _
      $region52: #{attention_refinement_nhwc.1} parent=47 // pred_fallthru
        _
    $region48: #{attention_refinement_nhwc.1} parent=5 // pred_fallthru
      _
    %p2825 = scmp.le.s32.totalorder 2, %s13
    // Predicated region
    $region53: #{attention_refinement_nhwc.1} parent=5 // pred_check
      %p2826 = pneg %p2825
    $region54: #{attention_refinement_nhwc.1} parent=5 // pred_check_branch
      %2828 = sbr.rel (%p2826) target = $region56
    $region55: #{attention_refinement_nhwc.1} parent=5 // pred_region
      %s2829 = ssub.s32 %s13, 2
      // Predicated region
      $region57: #{attention_refinement_nhwc.1} parent=55 // pred_check
        %p2830 = pneg %p194
      $region58: #{attention_refinement_nhwc.1} parent=55 // pred_check_branch
        %2832 = sbr.rel (%p2830) target = $region60
      $region59: #{attention_refinement_nhwc.1} parent=55 // pred_region
        %p2833 = scmp.lt.s32.totalorder %s19, 1
        %s2834 = scalar_select %p2833, %s19, 1
        %s2835 = smul.addr %s2834, 32
        %s2836 = smul.addr %s2835, 8
        %s2837 = scalar_lea.vmem %s7, %s2836
      $region60: #{attention_refinement_nhwc.1} parent=55 // pred_fallthru
        _
    $region56: #{attention_refinement_nhwc.1} parent=5 // pred_fallthru
      _
  $region6: #{attention_refinement_nhwc.1} parent=0 // loop_footer
    %s17 = sadd.s32 1, %s13
  $region7: #{attention_refinement_nhwc.1} parent=0 // loop_footer_branch
    %12 = sbr.rel target = $region3
  $region8: #{attention_refinement_nhwc.1} parent=0 // loop_exit
    _

</llo_original>
